<compile_context>
chip_gen: v5e
topology: v5e:2x2
jax: 0.10.0
libtpu: 0.0.40
codegen_flags: <defaults>
</compile_context>

<pallas_src>
import functools

import jax
import jax.numpy as jnp
from jax import lax
from jax.experimental import pallas as pl
from jax.experimental.pallas import tpu as pltpu


LN_EPS = 1e-5   # PyTorch LayerNorm default
P_SUB = 8       # time steps per hoisted-projection sub-block (bounds f32 temps)


def _round_up(n, m):
    return ((n + m - 1) // m) * m


def capture_kernel(
    x_ref,        # (T_chunk, B_tile, Dx)   bf16  time-major chunk (streamed)
    len_ref,      # (B_tile, 1)             i32
    w_emb_ref,    # (Dx, De_p)              bf16  resident (single-buffered)
    b_emb_ref,    # (1, De_p)               f32
    g1_ref,       # (1, De_p)               f32
    be1_ref,      # (1, De_p)               f32
    w_ih_ref,     # (De_p, 4*H_p)           bf16  gate order i, f, o, g
    w_hh_ref,     # (H_p, 4*H_p)            bf16
    b_lstm_ref,   # (1, 4*H_p)              f32   (b_ih + b_hh)
    g2_ref,       # (1, H_p)                f32
    be2_ref,      # (1, H_p)                f32
    w_fc_ref,     # (H_p, Dv_p)             bf16
    b_fc_ref,     # (1, Dv_p)               f32
    out_ref,      # (B_tile, Dv_p)          f32
    h_ref,        # scratch (B_tile, H_p)   f32
    c_ref,        # scratch (B_tile, H_p)   f32
    xp_ref,       # scratch (T_chunk, B_tile, 4*H_p) bf16  hoisted x-projection
    *, de, hid, unroll,
):
    t_blk = pl.program_id(1)
    n_t = pl.num_programs(1)
    Tc, Bt, Dx = x_ref.shape
    H_p = w_hh_ref.shape[0]
    G4 = w_ih_ref.shape[1]

    # ---- init recurrent state at the first time chunk ----
    @pl.when(t_blk == 0)
    def _init():
        h_ref[...] = jnp.zeros_like(h_ref)
        c_ref[...] = jnp.zeros_like(c_ref)

    # ---- hoisted input path for the whole chunk (off the serial path) ----
    # embedding_wa -> ln1 (masked over the real De lanes) -> tanh -> @ W_ih + b
    # Done in P_SUB-step sub-blocks so f32 intermediates stay small; result is
    # stored in bf16 (within the existing bf16-matmul error budget).
    inv_de = 1.0 / de
    n_sub = Tc // P_SUB

    def proj(s, carry):
        off = pl.multiple_of(s * P_SUB, P_SUB)
        xb = x_ref[pl.ds(off, P_SUB)].reshape(P_SUB * Bt, Dx)      # bf16
        emb = jnp.dot(xb, w_emb_ref[...],
                      preferred_element_type=jnp.float32) + b_emb_ref[...]
        lane_e = lax.broadcasted_iota(jnp.int32, emb.shape, 1)
        mask_e = (lane_e < de).astype(jnp.float32)
        mu = jnp.sum(emb, axis=-1, keepdims=True) * inv_de
        d = (emb - mu) * mask_e
        var = jnp.sum(d * d, axis=-1, keepdims=True) * inv_de
        emb = jnp.tanh(d * lax.rsqrt(var + LN_EPS) * g1_ref[...] + be1_ref[...])
        # dropout_wa: identity in eval mode
        xp = jnp.dot(emb.astype(jnp.bfloat16), w_ih_ref[...],
                     preferred_element_type=jnp.float32) + b_lstm_ref[...]
        xp_ref[pl.ds(off, P_SUB)] = xp.astype(jnp.bfloat16).reshape(P_SUB, Bt, G4)
        return carry

    lax.fori_loop(0, n_sub, proj, 0, unroll=False)

    # ---- serial LSTM recurrence: only h @ W_hh + gate math per step ----
    lens = len_ref[...]                       # (Bt, 1) int32
    w_hh = w_hh_ref[...]                      # bf16, resident
    t0 = t_blk * Tc

    def step(t, carry):
        h, c = carry
        gates = xp_ref[t].astype(jnp.float32) + jnp.dot(
            h.astype(jnp.bfloat16), w_hh, preferred_element_type=jnp.float32)
        # gate order (i, f, o, g): one sigmoid over a contiguous 3*H_p slab,
        # one tanh over the last H_p slab (all lane-aligned, H padded to H_p).
        ifo = jax.nn.sigmoid(gates[:, : 3 * H_p])
        g_g = jnp.tanh(gates[:, 3 * H_p:])
        i_g = ifo[:, :H_p]
        f_g = ifo[:, H_p:2 * H_p]
        o_g = ifo[:, 2 * H_p:]
        c_new = f_g * c + i_g * g_g
        h_new = o_g * jnp.tanh(c_new)
        # pack_padded_sequence: freeze state once t >= length[b]
        valid = (t0 + t) < lens               # (Bt, 1) bool
        return (jnp.where(valid, h_new, h), jnp.where(valid, c_new, c))

    h, c = lax.fori_loop(0, Tc, step, (h_ref[...], c_ref[...]), unroll=unroll)
    h_ref[...] = h
    c_ref[...] = c

    # ---- after the last chunk: ln2 -> fc_wr -> tanh, lane-dense store ----
    @pl.when(t_blk == n_t - 1)
    def _finish():
        lane_h = lax.broadcasted_iota(jnp.int32, h.shape, 1)
        mask_h = (lane_h < hid).astype(jnp.float32)
        mu2 = jnp.sum(h, axis=-1, keepdims=True) * (1.0 / hid)
        d2 = (h - mu2) * mask_h
        var2 = jnp.sum(d2 * d2, axis=-1, keepdims=True) * (1.0 / hid)
        h_n = d2 * lax.rsqrt(var2 + LN_EPS) * g2_ref[...] + be2_ref[...]
        # dropout_wr: identity in eval mode
        v = jnp.dot(h_n.astype(jnp.bfloat16), w_fc_ref[...],
                    preferred_element_type=jnp.float32) + b_fc_ref[...]
        out_ref[...] = jnp.tanh(v)


def _tpu_vmem_capacity_bytes():
    try:
        cap = int(getattr(pltpu.get_tpu_info(), "vmem_capacity_bytes", 0))
        if cap > 0:
            return cap
    except Exception:
        pass
    return 64 * 1024 * 1024   # conservative default: v7x per-TensorCore VMEM


def _vmem_bytes_estimate(t_chunk, b_tile, Dx, De_p, H_p, Dv_p):
    lane = lambda n: _round_up(n, 128)
    sub = lambda n: _round_up(n, 8)
    xp = t_chunk * b_tile * 4 * H_p * 2                    # bf16 xp scratch
    x_in = 2 * t_chunk * sub(b_tile) * lane(Dx) * 2        # bf16 x, double-buffered
    hc = 2 * b_tile * H_p * 4                              # h, c (f32)
    wts = (sub(Dx) * De_p + De_p * 4 * H_p
           + H_p * 4 * H_p + H_p * Dv_p) * 2               # bf16 weights, 1x buffered
    vecs = 8 * (3 * De_p + 4 * H_p + 2 * H_p + Dv_p) * 4   # biases / LN params
    out = 2 * b_tile * Dv_p * 4
    lens = 2 * sub(b_tile) * 128 * 4
    tmp = 2 * P_SUB * b_tile * (De_p + 4 * H_p) * 4        # f32 projection temps
    return xp + x_in + hc + wts + vecs + out + lens + tmp


def _select_tiles(B, T, Dx, De_p, H_p, Dv_p):
    vmem_cap = _tpu_vmem_capacity_bytes()
    small_vmem = vmem_cap < 96 * 1024 * 1024           # v7x-like: 64 MiB per TC
    vmem_limit = min(vmem_cap * 3 // 4, 100 * 1024 * 1024)

    # Batch tile. On v7x make sure the "parallel" batch axis yields >= 2 blocks
    # whenever the batch allows it, so both TensorCores are used.
    b_tile = min(_round_up(B, 8), 128)
    if small_vmem and 16 <= B <= 128:
        b_tile = min(b_tile, max(8, _round_up(_round_up(B, 16) // 2, 8)))

    # Time chunk: largest multiple of P_SUB (<=128) that fits the VMEM budget.
    budget = int(vmem_limit * 0.85)
    t_max = min(_round_up(T, P_SUB), 128)
    t_chunk = P_SUB
    tc = t_max
    while tc >= P_SUB:
        if _vmem_bytes_estimate(tc, b_tile, Dx, De_p, H_p, Dv_p) <= budget:
            t_chunk = tc
            break
        tc -= P_SUB
    return t_chunk, b_tile, int(vmem_limit)


def capture_module_forward(x_bt, lengths, params, *, t_chunk=None, b_tile=None):
    """x_bt: (B, T, Dx) batch-first (PyTorch convention). lengths: (B,) int."""
    B, T, Dx = x_bt.shape
    De = params["w_emb"].shape[1]
    H = params["w_hh"].shape[0]
    Dv = params["w_fc"].shape[1]

    De_p = _round_up(De, 128)
    H_p = _round_up(H, 128)
    Dv_p = _round_up(Dv, 128)

    auto_tc, auto_bt, vmem_limit = _select_tiles(B, T, Dx, De_p, H_p, Dv_p)
    if t_chunk is None:
        t_chunk = auto_tc
    if b_tile is None:
        b_tile = auto_bt
    t_chunk = _round_up(t_chunk, P_SUB)
    b_tile = _round_up(b_tile, 8)

    B_p = _round_up(B, b_tile)
    T_p = _round_up(T, t_chunk)
    nb, nt = B_p // b_tile, T_p // t_chunk

    # Time-major, zero-padded, bf16 activations (single wrapper pass).
    x_tm = jnp.transpose(x_bt, (1, 0, 2)).astype(jnp.bfloat16)
    x_tm = jnp.pad(x_tm, ((0, T_p - T), (0, B_p - B), (0, 0)))
    lens = jnp.pad(lengths.astype(jnp.int32), (0, B_p - B)).reshape(B_p, 1)

    # Zero-padded, bf16 weights. Gates are reordered (i,f,g,o)->(i,f,o,g) and
    # padded PER GATE so the sigmoid/tanh slabs are lane-aligned and padded
    # lanes never leak into real ones.
    gate_order = jnp.array([0, 1, 3, 2], dtype=jnp.int32)

    def pad_gate_cols(w):
        lead = w.shape[:-1]
        w4 = w.reshape(lead + (4, H))
        w4 = jnp.take(w4, gate_order, axis=-2)
        w4 = jnp.pad(w4, [(0, 0)] * (len(lead) + 1) + [(0, H_p - H)])
        return w4.reshape(lead + (4 * H_p,))

    w_emb = jnp.pad(params["w_emb"], ((0, 0), (0, De_p - De))).astype(jnp.bfloat16)
    b_emb = jnp.pad(params["b_emb"], ((0, 0), (0, De_p - De)))
    g1 = jnp.pad(params["ln1_g"], ((0, 0), (0, De_p - De)))
    be1 = jnp.pad(params["ln1_b"], ((0, 0), (0, De_p - De)))
    w_ih = pad_gate_cols(jnp.pad(params["w_ih"], ((0, De_p - De), (0, 0)))
                         ).astype(jnp.bfloat16)
    w_hh = pad_gate_cols(jnp.pad(params["w_hh"], ((0, H_p - H), (0, 0)))
                         ).astype(jnp.bfloat16)
    b_lstm = pad_gate_cols(params["b_lstm"])
    g2 = jnp.pad(params["ln2_g"], ((0, 0), (0, H_p - H)))
    be2 = jnp.pad(params["ln2_b"], ((0, 0), (0, H_p - H)))
    w_fc = jnp.pad(params["w_fc"], ((0, H_p - H), (0, Dv_p - Dv))).astype(jnp.bfloat16)
    b_fc = jnp.pad(params["b_fc"], ((0, 0), (0, Dv_p - Dv)))

    unroll = min(t_chunk, 8 if b_tile <= 64 else 4)
    kernel = functools.partial(capture_kernel, de=De, hid=H, unroll=unroll)

    # Resident operands: whole array in VMEM, single-buffered (no pipelining).
    resident = pl.BlockSpec(memory_space=pltpu.MemorySpace.VMEM)

    grid_spec = pltpu.PrefetchScalarGridSpec(
        num_scalar_prefetch=0,
        grid=(nb, nt),
        in_specs=[
            pl.BlockSpec((t_chunk, b_tile, Dx), lambda b, t: (t, b, 0)),
            pl.BlockSpec((b_tile, 1), lambda b, t: (b, 0)),
            resident,   # w_emb
            resident,   # b_emb
            resident,   # g1
            resident,   # be1
            resident,   # w_ih
            resident,   # w_hh
            resident,   # b_lstm
            resident,   # g2
            resident,   # be2
            resident,   # w_fc
            resident,   # b_fc
        ],
        out_specs=pl.BlockSpec((b_tile, Dv_p), lambda b, t: (b, 0)),
        scratch_shapes=[
            pltpu.VMEM((b_tile, H_p), jnp.float32),                   # h
            pltpu.VMEM((b_tile, H_p), jnp.float32),                   # c
            pltpu.VMEM((t_chunk, b_tile, 4 * H_p), jnp.bfloat16),     # x-projection
        ],
    )

    out = pl.pallas_call(
        kernel,
        out_shape=jax.ShapeDtypeStruct((B_p, Dv_p), jnp.float32),
        grid_spec=grid_spec,
        compiler_params=pltpu.CompilerParams(
            dimension_semantics=("parallel", "arbitrary"),
            vmem_limit_bytes=vmem_limit,
        ),
    )(x_tm, lens, w_emb, b_emb, g1, be1, w_ih, w_hh, b_lstm, g2, be2, w_fc, b_fc)

    return out[:B, :Dv]


def init_params(key, dim_x_t, dim_embedding_wa, dim_hidden, dim_v_j):
    ks = jax.random.split(key, 8)
    s = 0.1
    De, H, Dv = dim_embedding_wa, dim_hidden, dim_v_j
    return {
        "w_emb": s * jax.random.normal(ks[0], (dim_x_t, De), jnp.float32),
        "b_emb": s * jax.random.normal(ks[1], (1, De), jnp.float32),
        "ln1_g": jnp.ones((1, De), jnp.float32),
        "ln1_b": jnp.zeros((1, De), jnp.float32),
        "w_ih": s * jax.random.normal(ks[2], (De, 4 * H), jnp.float32),
        "w_hh": s * jax.random.normal(ks[3], (H, 4 * H), jnp.float32),
        "b_lstm": (s * jax.random.normal(ks[4], (1, 4 * H), jnp.float32)
                   + s * jax.random.normal(ks[5], (1, 4 * H), jnp.float32)),
        "ln2_g": jnp.ones((1, H), jnp.float32),
        "ln2_b": jnp.zeros((1, H), jnp.float32),
        "w_fc": s * jax.random.normal(ks[6], (H, Dv), jnp.float32),
        "b_fc": s * jax.random.normal(ks[7], (1, Dv), jnp.float32),
    }


def reference_forward(x, lengths, params):
    """Pure-JAX reference with matching bf16 matmul casts (gate order i,f,g,o)."""
    B, T, Dx = x.shape
    H = params["w_hh"].shape[0]
    bf = lambda a: a.astype(jnp.bfloat16)

    def ln(v, g, b):
        mu = jnp.mean(v, -1, keepdims=True)
        var = jnp.mean((v - mu) ** 2, -1, keepdims=True)
        return (v - mu) / jnp.sqrt(var + LN_EPS) * g + b

    emb = jnp.dot(bf(x.reshape(-1, Dx)), bf(params["w_emb"]),
                  preferred_element_type=jnp.float32) + params["b_emb"]
    emb = jnp.tanh(ln(emb, params["ln1_g"], params["ln1_b"]))
    xp = jnp.dot(bf(emb), bf(params["w_ih"]),
                 preferred_element_type=jnp.float32) + params["b_lstm"]
    xp = xp.reshape(B, T, -1)

    def step(carry, t):
        h, c = carry
        gates = xp[:, t] + jnp.dot(bf(h), bf(params["w_hh"]),
                                   preferred_element_type=jnp.float32)
        i, f, g, o = jnp.split(gates, 4, axis=-1)
        i, f, o = jax.nn.sigmoid(i), jax.nn.sigmoid(f), jax.nn.sigmoid(o)
        g = jnp.tanh(g)
        c_new = f * c + i * g
        h_new = o * jnp.tanh(c_new)
        valid = (t < lengths)[:, None]
        return (jnp.where(valid, h_new, h), jnp.where(valid, c_new, c)), None

    init = (jnp.zeros((B, H), jnp.float32), jnp.zeros((B, H), jnp.float32))
    (h, _), _ = lax.scan(step, init, jnp.arange(T))
    h = ln(h, params["ln2_g"], params["ln2_b"])
    return jnp.tanh(jnp.dot(bf(h), bf(params["w_fc"]),
                            preferred_element_type=jnp.float32) + params["b_fc"])


if __name__ == "__main__":
    B, T = 2, 8
    dim_x_t, dim_embedding_wa, dim_hidden, dim_v_j = 16, 32, 32, 16

    key = jax.random.PRNGKey(0)
    k_x, k_p = jax.random.split(key)

    x_t = jax.random.normal(k_x, (B, T, dim_x_t), jnp.float32)  # batch-first
    lengths = jnp.array([T, 5], dtype=jnp.int32)                # variable lengths
    params = init_params(k_p, dim_x_t, dim_embedding_wa, dim_hidden, dim_v_j)

    v_j = capture_module_forward(x_t, lengths, params)
    jax.block_until_ready(v_j)
    assert v_j.shape == (B, dim_v_j)

    ref = reference_forward(x_t, lengths, params)
    assert jnp.allclose(v_j, ref, atol=2e-2, rtol=2e-2), \
        float(jnp.max(jnp.abs(v_j - ref)))

    print("KERNEL_OK")
</pallas_src>

<mosaic_0001>
module attributes {stable_mosaic.version = 11 : i64} {
  func.func @capture_kernel(%arg0: i32, %arg1: i32, %arg2: memref<8x8x16xbf16, #tpu.memory_space<vmem>>, %arg3: memref<8x1xi32, #tpu.memory_space<vmem>>, %arg4: memref<16x128xbf16, #tpu.memory_space<vmem>>, %arg5: memref<1x128xf32, #tpu.memory_space<vmem>>, %arg6: memref<1x128xf32, #tpu.memory_space<vmem>>, %arg7: memref<1x128xf32, #tpu.memory_space<vmem>>, %arg8: memref<128x512xbf16, #tpu.memory_space<vmem>>, %arg9: memref<128x512xbf16, #tpu.memory_space<vmem>>, %arg10: memref<1x512xf32, #tpu.memory_space<vmem>>, %arg11: memref<1x128xf32, #tpu.memory_space<vmem>>, %arg12: memref<1x128xf32, #tpu.memory_space<vmem>>, %arg13: memref<128x128xbf16, #tpu.memory_space<vmem>>, %arg14: memref<1x128xf32, #tpu.memory_space<vmem>>, %arg15: memref<8x128xf32, #tpu.memory_space<vmem>>, %arg16: memref<8x128xf32, #tpu.memory_space<vmem>>, %arg17: memref<8x128xf32, #tpu.memory_space<vmem>>, %arg18: memref<8x8x512xbf16, #tpu.memory_space<vmem>>) attributes {dimension_semantics = [#tpu.dimension_semantics<parallel>, #tpu.dimension_semantics<arbitrary>], iteration_bounds = array<i64: 1, 1>, scalar_prefetch = 0 : i64, scratch_operands = 3 : i64, tpu.core_type = #tpu.core_type<tc>, window_params = [{transform_indices = @transform_0, window_bounds = array<i64: 8, 8, 16>}, {transform_indices = @transform_1, window_bounds = array<i64: 8, 1>}, {pipeline_mode = #tpu.pipeline_mode<synchronous>, transform_indices = @transform_2, window_bounds = array<i64: 16, 128>}, {pipeline_mode = #tpu.pipeline_mode<synchronous>, transform_indices = @transform_3, window_bounds = array<i64: 1, 128>}, {pipeline_mode = #tpu.pipeline_mode<synchronous>, transform_indices = @transform_4, window_bounds = array<i64: 1, 128>}, {pipeline_mode = #tpu.pipeline_mode<synchronous>, transform_indices = @transform_5, window_bounds = array<i64: 1, 128>}, {pipeline_mode = #tpu.pipeline_mode<synchronous>, transform_indices = @transform_6, window_bounds = array<i64: 128, 512>}, {pipeline_mode = #tpu.pipeline_mode<synchronous>, transform_indices = @transform_7, window_bounds = array<i64: 128, 512>}, {pipeline_mode = #tpu.pipeline_mode<synchronous>, transform_indices = @transform_8, window_bounds = array<i64: 1, 512>}, {pipeline_mode = #tpu.pipeline_mode<synchronous>, transform_indices = @transform_9, window_bounds = array<i64: 1, 128>}, {pipeline_mode = #tpu.pipeline_mode<synchronous>, transform_indices = @transform_10, window_bounds = array<i64: 1, 128>}, {pipeline_mode = #tpu.pipeline_mode<synchronous>, transform_indices = @transform_11, window_bounds = array<i64: 128, 128>}, {pipeline_mode = #tpu.pipeline_mode<synchronous>, transform_indices = @transform_12, window_bounds = array<i64: 1, 128>}, {transform_indices = @transform_13, window_bounds = array<i64: 8, 128>}]} {
    %c0_i32 = arith.constant 0 : i32
    %0 = arith.cmpi eq, %arg1, %c0_i32 : i32
    %1 = arith.extui %0 : i1 to i32
    %c0_i32_0 = arith.constant 0 : i32
    %2 = arith.cmpi ne, %1, %c0_i32_0 : i32
    scf.if %2 {
      %cst_73 = arith.constant 0.000000e+00 : f32
      %318 = vector.broadcast %cst_73 : f32 to vector<8x128xf32>
      %c0_74 = arith.constant 0 : index
      %c0_75 = arith.constant 0 : index
      %319 = vector.load %arg16[%c0_74, %c0_75] : memref<8x128xf32, #tpu.memory_space<vmem>>, vector<8x128xf32>
      tpu.vector_store %arg16[%c0_74, %c0_75], %318 {strides = array<i32>} : memref<8x128xf32, #tpu.memory_space<vmem>>, vector<8x128xf32>,
      %cst_76 = arith.constant 0.000000e+00 : f32
      %320 = vector.broadcast %cst_76 : f32 to vector<8x128xf32>
      %c0_77 = arith.constant 0 : index
      %c0_78 = arith.constant 0 : index
      %321 = vector.load %arg17[%c0_77, %c0_78] : memref<8x128xf32, #tpu.memory_space<vmem>>, vector<8x128xf32>
      tpu.vector_store %arg17[%c0_77, %c0_78], %320 {strides = array<i32>} : memref<8x128xf32, #tpu.memory_space<vmem>>, vector<8x128xf32>,
    } else {
    }
    %c0_i32_1 = arith.constant 0 : i32
    %c8_i32 = arith.constant 8 : i32
    %3 = arith.muli %c0_i32_1, %c8_i32 : i32
    %4 = tpu.assume_multiple %3, 8 : i32
    %5 = arith.index_cast %4 : i32 to index
    %c0 = arith.constant 0 : index
    %c0_2 = arith.constant 0 : index
    %6 = vector.load %arg2[%5, %c0, %c0_2] : memref<8x8x16xbf16, #tpu.memory_space<vmem>>, vector<8x8x16xbf16>
    %7 = vector.shape_cast %6 : vector<8x8x16xbf16> to vector<64x16xbf16>
    %c0_3 = arith.constant 0 : index
    %c0_4 = arith.constant 0 : index
    %8 = vector.load %arg4[%c0_3, %c0_4] : memref<16x128xbf16, #tpu.memory_space<vmem>>, vector<16x128xbf16>
    %cst = arith.constant dense<0.000000e+00> : vector<64x128xf32>
    %9 = tpu.matmul %7, %8, %cst {dimension_numbers = #tpu.dot_dimension_numbers<[1], [0], [0], [1], [0, 0, 1, 1], [], []>} : vector<64x16xbf16>, vector<16x128xbf16>, vector<64x128xf32> -> vector<64x128xf32>
    %c0_5 = arith.constant 0 : index
    %c0_6 = arith.constant 0 : index
    %10 = vector.load %arg5[%c0_5, %c0_6] : memref<1x128xf32, #tpu.memory_space<vmem>>, vector<1x128xf32>
    %11 = vector.broadcast %10 : vector<1x128xf32> to vector<64x128xf32>
    %12 = arith.addf %9, %11 : vector<64x128xf32>
    %13 = tpu.iota {dimensions = array<i32: 1>} : vector<64x128xi32>
    %c32_i32 = arith.constant 32 : i32
    %14 = vector.broadcast %c32_i32 : i32 to vector<64x128xi32>
    %15 = arith.cmpi slt, %13, %14 : vector<64x128xi32>
    %16 = arith.extui %15 : vector<64x128xi1> to vector<64x128xi32>
    %17 = arith.sitofp %16 : vector<64x128xi32> to vector<64x128xf32>
    %cst_7 = arith.constant dense<0.000000e+00> : vector<64xf32>
    %18 = vector.multi_reduction <add>, %12, %cst_7 [1] : vector<64x128xf32> to vector<64xf32>
    %19 = vector.shape_cast %18 : vector<64xf32> to vector<64x1xf32>
    %cst_8 = arith.constant 3.125000e-02 : f32
    %20 = vector.broadcast %cst_8 : f32 to vector<64x1xf32>
    %21 = arith.mulf %19, %20 : vector<64x1xf32>
    %22 = vector.broadcast %21 : vector<64x1xf32> to vector<64x128xf32>
    %23 = arith.subf %12, %22 : vector<64x128xf32>
    %24 = arith.mulf %23, %17 : vector<64x128xf32>
    %25 = arith.mulf %24, %24 : vector<64x128xf32>
    %cst_9 = arith.constant dense<0.000000e+00> : vector<64xf32>
    %26 = vector.multi_reduction <add>, %25, %cst_9 [1] : vector<64x128xf32> to vector<64xf32>
    %27 = vector.shape_cast %26 : vector<64xf32> to vector<64x1xf32>
    %cst_10 = arith.constant 3.125000e-02 : f32
    %28 = vector.broadcast %cst_10 : f32 to vector<64x1xf32>
    %29 = arith.mulf %27, %28 : vector<64x1xf32>
    %cst_11 = arith.constant 9.99999974E-6 : f32
    %30 = vector.broadcast %cst_11 : f32 to vector<64x1xf32>
    %31 = arith.addf %29, %30 : vector<64x1xf32>
    %32 = math.rsqrt %31 : vector<64x1xf32>
    %33 = vector.broadcast %32 : vector<64x1xf32> to vector<64x128xf32>
    %34 = arith.mulf %24, %33 : vector<64x128xf32>
    %c0_12 = arith.constant 0 : index
    %c0_13 = arith.constant 0 : index
    %35 = vector.load %arg6[%c0_12, %c0_13] : memref<1x128xf32, #tpu.memory_space<vmem>>, vector<1x128xf32>
    %36 = vector.broadcast %35 : vector<1x128xf32> to vector<64x128xf32>
    %37 = arith.mulf %34, %36 : vector<64x128xf32>
    %c0_14 = arith.constant 0 : index
    %c0_15 = arith.constant 0 : index
    %38 = vector.load %arg7[%c0_14, %c0_15] : memref<1x128xf32, #tpu.memory_space<vmem>>, vector<1x128xf32>
    %39 = vector.broadcast %38 : vector<1x128xf32> to vector<64x128xf32>
    %40 = arith.addf %37, %39 : vector<64x128xf32>
    %41 = math.tanh %40 : vector<64x128xf32>
    %42 = arith.truncf %41 : vector<64x128xf32> to vector<64x128xbf16>
    %c0_16 = arith.constant 0 : index
    %c0_17 = arith.constant 0 : index
    %43 = vector.load %arg8[%c0_16, %c0_17] : memref<128x512xbf16, #tpu.memory_space<vmem>>, vector<128x512xbf16>
    %cst_18 = arith.constant dense<0.000000e+00> : vector<64x512xf32>
    %44 = tpu.matmul %42, %43, %cst_18 {dimension_numbers = #tpu.dot_dimension_numbers<[1], [0], [0], [1], [0, 0, 1, 1], [], []>} : vector<64x128xbf16>, vector<128x512xbf16>, vector<64x512xf32> -> vector<64x512xf32>
    %c0_19 = arith.constant 0 : index
    %c0_20 = arith.constant 0 : index
    %45 = vector.load %arg10[%c0_19, %c0_20] : memref<1x512xf32, #tpu.memory_space<vmem>>, vector<1x512xf32>
    %46 = vector.broadcast %45 : vector<1x512xf32> to vector<64x512xf32>
    %47 = arith.addf %44, %46 : vector<64x512xf32>
    %48 = arith.truncf %47 : vector<64x512xf32> to vector<64x512xbf16>
    %49 = vector.shape_cast %48 : vector<64x512xbf16> to vector<8x8x512xbf16>
    %50 = arith.index_cast %4 : i32 to index
    %c0_21 = arith.constant 0 : index
    %c0_22 = arith.constant 0 : index
    %51 = vector.load %arg18[%50, %c0_21, %c0_22] : memref<8x8x512xbf16, #tpu.memory_space<vmem>>, vector<8x8x512xbf16>
    tpu.vector_store %arg18[%50, %c0_21, %c0_22], %49 {strides = array<i32>} : memref<8x8x512xbf16, #tpu.memory_space<vmem>>, vector<8x8x512xbf16>,
    %c1_i32 = arith.constant 1 : i32
    %c0_23 = arith.constant 0 : index
    %c0_24 = arith.constant 0 : index
    %52 = vector.load %arg3[%c0_23, %c0_24] : memref<8x1xi32, #tpu.memory_space<vmem>>, vector<8x1xi32>
    %c0_25 = arith.constant 0 : index
    %c0_26 = arith.constant 0 : index
    %53 = vector.load %arg9[%c0_25, %c0_26] : memref<128x512xbf16, #tpu.memory_space<vmem>>, vector<128x512xbf16>
    %c8_i32_27 = arith.constant 8 : i32
    %54 = arith.muli %arg1, %c8_i32_27 : i32
    %c0_28 = arith.constant 0 : index
    %c0_29 = arith.constant 0 : index
    %55 = vector.load %arg16[%c0_28, %c0_29] : memref<8x128xf32, #tpu.memory_space<vmem>>, vector<8x128xf32>
    %c0_30 = arith.constant 0 : index
    %c0_31 = arith.constant 0 : index
    %56 = vector.load %arg17[%c0_30, %c0_31] : memref<8x128xf32, #tpu.memory_space<vmem>>, vector<8x128xf32>
    %c0_i32_32 = arith.constant 0 : i32
    %57 = arith.index_cast %c0_i32_32 : i32 to index
    %c0_33 = arith.constant 0 : index
    %c0_34 = arith.constant 0 : index
    %58 = vector.load %arg18[%57, %c0_33, %c0_34] : memref<8x8x512xbf16, #tpu.memory_space<vmem>>, vector<1x8x512xbf16>
    %59 = vector.shape_cast %58 : vector<1x8x512xbf16> to vector<8x512xbf16>
    %60 = arith.extf %59 : vector<8x512xbf16> to vector<8x512xf32>
    %61 = arith.truncf %55 : vector<8x128xf32> to vector<8x128xbf16>
    %cst_35 = arith.constant dense<0.000000e+00> : vector<8x512xf32>
    %62 = tpu.matmul %61, %53, %cst_35 {dimension_numbers = #tpu.dot_dimension_numbers<[1], [0], [0], [1], [0, 0, 1, 1], [], []>} : vector<8x128xbf16>, vector<128x512xbf16>, vector<8x512xf32> -> vector<8x512xf32>
    %63 = arith.addf %60, %62 : vector<8x512xf32>
    %64 = vector.extract_strided_slice %63 {offsets = [0, 0], sizes = [8, 384], strides = [1, 1]} : vector<8x512xf32> to vector<8x384xf32>
    %65 = arith.negf %64 : vector<8x384xf32>
    %66 = math.exp %65 : vector<8x384xf32>
    %cst_36 = arith.constant 1.000000e+00 : f32
    %67 = vector.broadcast %cst_36 : f32 to vector<8x384xf32>
    %68 = arith.addf %67, %66 : vector<8x384xf32>
    %69 = arith.divf %67, %68 : vector<8x384xf32>
    %70 = vector.extract_strided_slice %63 {offsets = [0, 384], sizes = [8, 128], strides = [1, 1]} : vector<8x512xf32> to vector<8x128xf32>
    %71 = math.tanh %70 : vector<8x128xf32>
    %72 = vector.extract_strided_slice %69 {offsets = [0, 0], sizes = [8, 128], strides = [1, 1]} : vector<8x384xf32> to vector<8x128xf32>
    %73 = vector.extract_strided_slice %69 {offsets = [0, 128], sizes = [8, 128], strides = [1, 1]} : vector<8x384xf32> to vector<8x128xf32>
    %74 = vector.extract_strided_slice %69 {offsets = [0, 256], sizes = [8, 128], strides = [1, 1]} : vector<8x384xf32> to vector<8x128xf32>
    %75 = arith.mulf %73, %56 : vector<8x128xf32>
    %76 = arith.mulf %72, %71 : vector<8x128xf32>
    %77 = arith.addf %75, %76 : vector<8x128xf32>
    %78 = math.tanh %77 : vector<8x128xf32>
    %79 = arith.mulf %74, %78 : vector<8x128xf32>
    %80 = arith.addi %54, %c0_i32_32 : i32
    %81 = vector.broadcast %80 : i32 to vector<8x1xi32>
    %82 = arith.cmpi slt, %81, %52 : vector<8x1xi32>
    %83 = vector.shape_cast %82 : vector<8x1xi1> to vector<8x1xi1>
    %84 = vector.broadcast %83 : vector<8x1xi1> to vector<8x128xi1>
    %85 = arith.select %84, %79, %55 : vector<8x128xi1>, vector<8x128xf32>
    %86 = vector.shape_cast %82 : vector<8x1xi1> to vector<8x1xi1>
    %87 = vector.broadcast %86 : vector<8x1xi1> to vector<8x128xi1>
    %88 = arith.select %87, %77, %56 : vector<8x128xi1>, vector<8x128xf32>
    %c1_i32_37 = arith.constant 1 : i32
    %89 = arith.index_cast %c1_i32_37 : i32 to index
    %c0_38 = arith.constant 0 : index
    %c0_39 = arith.constant 0 : index
    %90 = vector.load %arg18[%89, %c0_38, %c0_39] : memref<8x8x512xbf16, #tpu.memory_space<vmem>>, vector<1x8x512xbf16>
    %91 = vector.shape_cast %90 : vector<1x8x512xbf16> to vector<8x512xbf16>
    %92 = arith.extf %91 : vector<8x512xbf16> to vector<8x512xf32>
    %93 = arith.truncf %85 : vector<8x128xf32> to vector<8x128xbf16>
    %cst_40 = arith.constant dense<0.000000e+00> : vector<8x512xf32>
    %94 = tpu.matmul %93, %53, %cst_40 {dimension_numbers = #tpu.dot_dimension_numbers<[1], [0], [0], [1], [0, 0, 1, 1], [], []>} : vector<8x128xbf16>, vector<128x512xbf16>, vector<8x512xf32> -> vector<8x512xf32>
    %95 = arith.addf %92, %94 : vector<8x512xf32>
    %96 = vector.extract_strided_slice %95 {offsets = [0, 0], sizes = [8, 384], strides = [1, 1]} : vector<8x512xf32> to vector<8x384xf32>
    %97 = arith.negf %96 : vector<8x384xf32>
    %98 = math.exp %97 : vector<8x384xf32>
    %cst_41 = arith.constant 1.000000e+00 : f32
    %99 = vector.broadcast %cst_41 : f32 to vector<8x384xf32>
    %100 = arith.addf %99, %98 : vector<8x384xf32>
    %101 = arith.divf %99, %100 : vector<8x384xf32>
    %102 = vector.extract_strided_slice %95 {offsets = [0, 384], sizes = [8, 128], strides = [1, 1]} : vector<8x512xf32> to vector<8x128xf32>
    %103 = math.tanh %102 : vector<8x128xf32>
    %104 = vector.extract_strided_slice %101 {offsets = [0, 0], sizes = [8, 128], strides = [1, 1]} : vector<8x384xf32> to vector<8x128xf32>
    %105 = vector.extract_strided_slice %101 {offsets = [0, 128], sizes = [8, 128], strides = [1, 1]} : vector<8x384xf32> to vector<8x128xf32>
    %106 = vector.extract_strided_slice %101 {offsets = [0, 256], sizes = [8, 128], strides = [1, 1]} : vector<8x384xf32> to vector<8x128xf32>
    %107 = arith.mulf %105, %88 : vector<8x128xf32>
    %108 = arith.mulf %104, %103 : vector<8x128xf32>
    %109 = arith.addf %107, %108 : vector<8x128xf32>
    %110 = math.tanh %109 : vector<8x128xf32>
    %111 = arith.mulf %106, %110 : vector<8x128xf32>
    %112 = arith.addi %54, %c1_i32_37 : i32
    %113 = vector.broadcast %112 : i32 to vector<8x1xi32>
    %114 = arith.cmpi slt, %113, %52 : vector<8x1xi32>
    %115 = vector.shape_cast %114 : vector<8x1xi1> to vector<8x1xi1>
    %116 = vector.broadcast %115 : vector<8x1xi1> to vector<8x128xi1>
    %117 = arith.select %116, %111, %85 : vector<8x128xi1>, vector<8x128xf32>
    %118 = vector.shape_cast %114 : vector<8x1xi1> to vector<8x1xi1>
    %119 = vector.broadcast %118 : vector<8x1xi1> to vector<8x128xi1>
    %120 = arith.select %119, %109, %88 : vector<8x128xi1>, vector<8x128xf32>
    %c2_i32 = arith.constant 2 : i32
    %121 = arith.index_cast %c2_i32 : i32 to index
    %c0_42 = arith.constant 0 : index
    %c0_43 = arith.constant 0 : index
    %122 = vector.load %arg18[%121, %c0_42, %c0_43] : memref<8x8x512xbf16, #tpu.memory_space<vmem>>, vector<1x8x512xbf16>
    %123 = vector.shape_cast %122 : vector<1x8x512xbf16> to vector<8x512xbf16>
    %124 = arith.extf %123 : vector<8x512xbf16> to vector<8x512xf32>
    %125 = arith.truncf %117 : vector<8x128xf32> to vector<8x128xbf16>
    %cst_44 = arith.constant dense<0.000000e+00> : vector<8x512xf32>
    %126 = tpu.matmul %125, %53, %cst_44 {dimension_numbers = #tpu.dot_dimension_numbers<[1], [0], [0], [1], [0, 0, 1, 1], [], []>} : vector<8x128xbf16>, vector<128x512xbf16>, vector<8x512xf32> -> vector<8x512xf32>
    %127 = arith.addf %124, %126 : vector<8x512xf32>
    %128 = vector.extract_strided_slice %127 {offsets = [0, 0], sizes = [8, 384], strides = [1, 1]} : vector<8x512xf32> to vector<8x384xf32>
    %129 = arith.negf %128 : vector<8x384xf32>
    %130 = math.exp %129 : vector<8x384xf32>
    %cst_45 = arith.constant 1.000000e+00 : f32
    %131 = vector.broadcast %cst_45 : f32 to vector<8x384xf32>
    %132 = arith.addf %131, %130 : vector<8x384xf32>
    %133 = arith.divf %131, %132 : vector<8x384xf32>
    %134 = vector.extract_strided_slice %127 {offsets = [0, 384], sizes = [8, 128], strides = [1, 1]} : vector<8x512xf32> to vector<8x128xf32>
    %135 = math.tanh %134 : vector<8x128xf32>
    %136 = vector.extract_strided_slice %133 {offsets = [0, 0], sizes = [8, 128], strides = [1, 1]} : vector<8x384xf32> to vector<8x128xf32>
    %137 = vector.extract_strided_slice %133 {offsets = [0, 128], sizes = [8, 128], strides = [1, 1]} : vector<8x384xf32> to vector<8x128xf32>
    %138 = vector.extract_strided_slice %133 {offsets = [0, 256], sizes = [8, 128], strides = [1, 1]} : vector<8x384xf32> to vector<8x128xf32>
    %139 = arith.mulf %137, %120 : vector<8x128xf32>
    %140 = arith.mulf %136, %135 : vector<8x128xf32>
    %141 = arith.addf %139, %140 : vector<8x128xf32>
    %142 = math.tanh %141 : vector<8x128xf32>
    %143 = arith.mulf %138, %142 : vector<8x128xf32>
    %144 = arith.addi %54, %c2_i32 : i32
    %145 = vector.broadcast %144 : i32 to vector<8x1xi32>
    %146 = arith.cmpi slt, %145, %52 : vector<8x1xi32>
    %147 = vector.shape_cast %146 : vector<8x1xi1> to vector<8x1xi1>
    %148 = vector.broadcast %147 : vector<8x1xi1> to vector<8x128xi1>
    %149 = arith.select %148, %143, %117 : vector<8x128xi1>, vector<8x128xf32>
    %150 = vector.shape_cast %146 : vector<8x1xi1> to vector<8x1xi1>
    %151 = vector.broadcast %150 : vector<8x1xi1> to vector<8x128xi1>
    %152 = arith.select %151, %141, %120 : vector<8x128xi1>, vector<8x128xf32>
    %c3_i32 = arith.constant 3 : i32
    %153 = arith.index_cast %c3_i32 : i32 to index
    %c0_46 = arith.constant 0 : index
    %c0_47 = arith.constant 0 : index
    %154 = vector.load %arg18[%153, %c0_46, %c0_47] : memref<8x8x512xbf16, #tpu.memory_space<vmem>>, vector<1x8x512xbf16>
    %155 = vector.shape_cast %154 : vector<1x8x512xbf16> to vector<8x512xbf16>
    %156 = arith.extf %155 : vector<8x512xbf16> to vector<8x512xf32>
    %157 = arith.truncf %149 : vector<8x128xf32> to vector<8x128xbf16>
    %cst_48 = arith.constant dense<0.000000e+00> : vector<8x512xf32>
    %158 = tpu.matmul %157, %53, %cst_48 {dimension_numbers = #tpu.dot_dimension_numbers<[1], [0], [0], [1], [0, 0, 1, 1], [], []>} : vector<8x128xbf16>, vector<128x512xbf16>, vector<8x512xf32> -> vector<8x512xf32>
    %159 = arith.addf %156, %158 : vector<8x512xf32>
    %160 = vector.extract_strided_slice %159 {offsets = [0, 0], sizes = [8, 384], strides = [1, 1]} : vector<8x512xf32> to vector<8x384xf32>
    %161 = arith.negf %160 : vector<8x384xf32>
    %162 = math.exp %161 : vector<8x384xf32>
    %cst_49 = arith.constant 1.000000e+00 : f32
    %163 = vector.broadcast %cst_49 : f32 to vector<8x384xf32>
    %164 = arith.addf %163, %162 : vector<8x384xf32>
    %165 = arith.divf %163, %164 : vector<8x384xf32>
    %166 = vector.extract_strided_slice %159 {offsets = [0, 384], sizes = [8, 128], strides = [1, 1]} : vector<8x512xf32> to vector<8x128xf32>
    %167 = math.tanh %166 : vector<8x128xf32>
    %168 = vector.extract_strided_slice %165 {offsets = [0, 0], sizes = [8, 128], strides = [1, 1]} : vector<8x384xf32> to vector<8x128xf32>
    %169 = vector.extract_strided_slice %165 {offsets = [0, 128], sizes = [8, 128], strides = [1, 1]} : vector<8x384xf32> to vector<8x128xf32>
    %170 = vector.extract_strided_slice %165 {offsets = [0, 256], sizes = [8, 128], strides = [1, 1]} : vector<8x384xf32> to vector<8x128xf32>
    %171 = arith.mulf %169, %152 : vector<8x128xf32>
    %172 = arith.mulf %168, %167 : vector<8x128xf32>
    %173 = arith.addf %171, %172 : vector<8x128xf32>
    %174 = math.tanh %173 : vector<8x128xf32>
    %175 = arith.mulf %170, %174 : vector<8x128xf32>
    %176 = arith.addi %54, %c3_i32 : i32
    %177 = vector.broadcast %176 : i32 to vector<8x1xi32>
    %178 = arith.cmpi slt, %177, %52 : vector<8x1xi32>
    %179 = vector.shape_cast %178 : vector<8x1xi1> to vector<8x1xi1>
    %180 = vector.broadcast %179 : vector<8x1xi1> to vector<8x128xi1>
    %181 = arith.select %180, %175, %149 : vector<8x128xi1>, vector<8x128xf32>
    %182 = vector.shape_cast %178 : vector<8x1xi1> to vector<8x1xi1>
    %183 = vector.broadcast %182 : vector<8x1xi1> to vector<8x128xi1>
    %184 = arith.select %183, %173, %152 : vector<8x128xi1>, vector<8x128xf32>
    %c4_i32 = arith.constant 4 : i32
    %185 = arith.index_cast %c4_i32 : i32 to index
    %c0_50 = arith.constant 0 : index
    %c0_51 = arith.constant 0 : index
    %186 = vector.load %arg18[%185, %c0_50, %c0_51] : memref<8x8x512xbf16, #tpu.memory_space<vmem>>, vector<1x8x512xbf16>
    %187 = vector.shape_cast %186 : vector<1x8x512xbf16> to vector<8x512xbf16>
    %188 = arith.extf %187 : vector<8x512xbf16> to vector<8x512xf32>
    %189 = arith.truncf %181 : vector<8x128xf32> to vector<8x128xbf16>
    %cst_52 = arith.constant dense<0.000000e+00> : vector<8x512xf32>
    %190 = tpu.matmul %189, %53, %cst_52 {dimension_numbers = #tpu.dot_dimension_numbers<[1], [0], [0], [1], [0, 0, 1, 1], [], []>} : vector<8x128xbf16>, vector<128x512xbf16>, vector<8x512xf32> -> vector<8x512xf32>
    %191 = arith.addf %188, %190 : vector<8x512xf32>
    %192 = vector.extract_strided_slice %191 {offsets = [0, 0], sizes = [8, 384], strides = [1, 1]} : vector<8x512xf32> to vector<8x384xf32>
    %193 = arith.negf %192 : vector<8x384xf32>
    %194 = math.exp %193 : vector<8x384xf32>
    %cst_53 = arith.constant 1.000000e+00 : f32
    %195 = vector.broadcast %cst_53 : f32 to vector<8x384xf32>
    %196 = arith.addf %195, %194 : vector<8x384xf32>
    %197 = arith.divf %195, %196 : vector<8x384xf32>
    %198 = vector.extract_strided_slice %191 {offsets = [0, 384], sizes = [8, 128], strides = [1, 1]} : vector<8x512xf32> to vector<8x128xf32>
    %199 = math.tanh %198 : vector<8x128xf32>
    %200 = vector.extract_strided_slice %197 {offsets = [0, 0], sizes = [8, 128], strides = [1, 1]} : vector<8x384xf32> to vector<8x128xf32>
    %201 = vector.extract_strided_slice %197 {offsets = [0, 128], sizes = [8, 128], strides = [1, 1]} : vector<8x384xf32> to vector<8x128xf32>
    %202 = vector.extract_strided_slice %197 {offsets = [0, 256], sizes = [8, 128], strides = [1, 1]} : vector<8x384xf32> to vector<8x128xf32>
    %203 = arith.mulf %201, %184 : vector<8x128xf32>
    %204 = arith.mulf %200, %199 : vector<8x128xf32>
    %205 = arith.addf %203, %204 : vector<8x128xf32>
    %206 = math.tanh %205 : vector<8x128xf32>
    %207 = arith.mulf %202, %206 : vector<8x128xf32>
    %208 = arith.addi %54, %c4_i32 : i32
    %209 = vector.broadcast %208 : i32 to vector<8x1xi32>
    %210 = arith.cmpi slt, %209, %52 : vector<8x1xi32>
    %211 = vector.shape_cast %210 : vector<8x1xi1> to vector<8x1xi1>
    %212 = vector.broadcast %211 : vector<8x1xi1> to vector<8x128xi1>
    %213 = arith.select %212, %207, %181 : vector<8x128xi1>, vector<8x128xf32>
    %214 = vector.shape_cast %210 : vector<8x1xi1> to vector<8x1xi1>
    %215 = vector.broadcast %214 : vector<8x1xi1> to vector<8x128xi1>
    %216 = arith.select %215, %205, %184 : vector<8x128xi1>, vector<8x128xf32>
    %c5_i32 = arith.constant 5 : i32
    %217 = arith.index_cast %c5_i32 : i32 to index
    %c0_54 = arith.constant 0 : index
    %c0_55 = arith.constant 0 : index
    %218 = vector.load %arg18[%217, %c0_54, %c0_55] : memref<8x8x512xbf16, #tpu.memory_space<vmem>>, vector<1x8x512xbf16>
    %219 = vector.shape_cast %218 : vector<1x8x512xbf16> to vector<8x512xbf16>
    %220 = arith.extf %219 : vector<8x512xbf16> to vector<8x512xf32>
    %221 = arith.truncf %213 : vector<8x128xf32> to vector<8x128xbf16>
    %cst_56 = arith.constant dense<0.000000e+00> : vector<8x512xf32>
    %222 = tpu.matmul %221, %53, %cst_56 {dimension_numbers = #tpu.dot_dimension_numbers<[1], [0], [0], [1], [0, 0, 1, 1], [], []>} : vector<8x128xbf16>, vector<128x512xbf16>, vector<8x512xf32> -> vector<8x512xf32>
    %223 = arith.addf %220, %222 : vector<8x512xf32>
    %224 = vector.extract_strided_slice %223 {offsets = [0, 0], sizes = [8, 384], strides = [1, 1]} : vector<8x512xf32> to vector<8x384xf32>
    %225 = arith.negf %224 : vector<8x384xf32>
    %226 = math.exp %225 : vector<8x384xf32>
    %cst_57 = arith.constant 1.000000e+00 : f32
    %227 = vector.broadcast %cst_57 : f32 to vector<8x384xf32>
    %228 = arith.addf %227, %226 : vector<8x384xf32>
    %229 = arith.divf %227, %228 : vector<8x384xf32>
    %230 = vector.extract_strided_slice %223 {offsets = [0, 384], sizes = [8, 128], strides = [1, 1]} : vector<8x512xf32> to vector<8x128xf32>
    %231 = math.tanh %230 : vector<8x128xf32>
    %232 = vector.extract_strided_slice %229 {offsets = [0, 0], sizes = [8, 128], strides = [1, 1]} : vector<8x384xf32> to vector<8x128xf32>
    %233 = vector.extract_strided_slice %229 {offsets = [0, 128], sizes = [8, 128], strides = [1, 1]} : vector<8x384xf32> to vector<8x128xf32>
    %234 = vector.extract_strided_slice %229 {offsets = [0, 256], sizes = [8, 128], strides = [1, 1]} : vector<8x384xf32> to vector<8x128xf32>
    %235 = arith.mulf %233, %216 : vector<8x128xf32>
    %236 = arith.mulf %232, %231 : vector<8x128xf32>
    %237 = arith.addf %235, %236 : vector<8x128xf32>
    %238 = math.tanh %237 : vector<8x128xf32>
    %239 = arith.mulf %234, %238 : vector<8x128xf32>
    %240 = arith.addi %54, %c5_i32 : i32
    %241 = vector.broadcast %240 : i32 to vector<8x1xi32>
    %242 = arith.cmpi slt, %241, %52 : vector<8x1xi32>
    %243 = vector.shape_cast %242 : vector<8x1xi1> to vector<8x1xi1>
    %244 = vector.broadcast %243 : vector<8x1xi1> to vector<8x128xi1>
    %245 = arith.select %244, %239, %213 : vector<8x128xi1>, vector<8x128xf32>
    %246 = vector.shape_cast %242 : vector<8x1xi1> to vector<8x1xi1>
    %247 = vector.broadcast %246 : vector<8x1xi1> to vector<8x128xi1>
    %248 = arith.select %247, %237, %216 : vector<8x128xi1>, vector<8x128xf32>
    %c6_i32 = arith.constant 6 : i32
    %249 = arith.index_cast %c6_i32 : i32 to index
    %c0_58 = arith.constant 0 : index
    %c0_59 = arith.constant 0 : index
    %250 = vector.load %arg18[%249, %c0_58, %c0_59] : memref<8x8x512xbf16, #tpu.memory_space<vmem>>, vector<1x8x512xbf16>
    %251 = vector.shape_cast %250 : vector<1x8x512xbf16> to vector<8x512xbf16>
    %252 = arith.extf %251 : vector<8x512xbf16> to vector<8x512xf32>
    %253 = arith.truncf %245 : vector<8x128xf32> to vector<8x128xbf16>
    %cst_60 = arith.constant dense<0.000000e+00> : vector<8x512xf32>
    %254 = tpu.matmul %253, %53, %cst_60 {dimension_numbers = #tpu.dot_dimension_numbers<[1], [0], [0], [1], [0, 0, 1, 1], [], []>} : vector<8x128xbf16>, vector<128x512xbf16>, vector<8x512xf32> -> vector<8x512xf32>
    %255 = arith.addf %252, %254 : vector<8x512xf32>
    %256 = vector.extract_strided_slice %255 {offsets = [0, 0], sizes = [8, 384], strides = [1, 1]} : vector<8x512xf32> to vector<8x384xf32>
    %257 = arith.negf %256 : vector<8x384xf32>
    %258 = math.exp %257 : vector<8x384xf32>
    %cst_61 = arith.constant 1.000000e+00 : f32
    %259 = vector.broadcast %cst_61 : f32 to vector<8x384xf32>
    %260 = arith.addf %259, %258 : vector<8x384xf32>
    %261 = arith.divf %259, %260 : vector<8x384xf32>
    %262 = vector.extract_strided_slice %255 {offsets = [0, 384], sizes = [8, 128], strides = [1, 1]} : vector<8x512xf32> to vector<8x128xf32>
    %263 = math.tanh %262 : vector<8x128xf32>
    %264 = vector.extract_strided_slice %261 {offsets = [0, 0], sizes = [8, 128], strides = [1, 1]} : vector<8x384xf32> to vector<8x128xf32>
    %265 = vector.extract_strided_slice %261 {offsets = [0, 128], sizes = [8, 128], strides = [1, 1]} : vector<8x384xf32> to vector<8x128xf32>
    %266 = vector.extract_strided_slice %261 {offsets = [0, 256], sizes = [8, 128], strides = [1, 1]} : vector<8x384xf32> to vector<8x128xf32>
    %267 = arith.mulf %265, %248 : vector<8x128xf32>
    %268 = arith.mulf %264, %263 : vector<8x128xf32>
    %269 = arith.addf %267, %268 : vector<8x128xf32>
    %270 = math.tanh %269 : vector<8x128xf32>
    %271 = arith.mulf %266, %270 : vector<8x128xf32>
    %272 = arith.addi %54, %c6_i32 : i32
    %273 = vector.broadcast %272 : i32 to vector<8x1xi32>
    %274 = arith.cmpi slt, %273, %52 : vector<8x1xi32>
    %275 = vector.shape_cast %274 : vector<8x1xi1> to vector<8x1xi1>
    %276 = vector.broadcast %275 : vector<8x1xi1> to vector<8x128xi1>
    %277 = arith.select %276, %271, %245 : vector<8x128xi1>, vector<8x128xf32>
    %278 = vector.shape_cast %274 : vector<8x1xi1> to vector<8x1xi1>
    %279 = vector.broadcast %278 : vector<8x1xi1> to vector<8x128xi1>
    %280 = arith.select %279, %269, %248 : vector<8x128xi1>, vector<8x128xf32>
    %c7_i32 = arith.constant 7 : i32
    %281 = arith.index_cast %c7_i32 : i32 to index
    %c0_62 = arith.constant 0 : index
    %c0_63 = arith.constant 0 : index
    %282 = vector.load %arg18[%281, %c0_62, %c0_63] : memref<8x8x512xbf16, #tpu.memory_space<vmem>>, vector<1x8x512xbf16>
    %283 = vector.shape_cast %282 : vector<1x8x512xbf16> to vector<8x512xbf16>
    %284 = arith.extf %283 : vector<8x512xbf16> to vector<8x512xf32>
    %285 = arith.truncf %277 : vector<8x128xf32> to vector<8x128xbf16>
    %cst_64 = arith.constant dense<0.000000e+00> : vector<8x512xf32>
    %286 = tpu.matmul %285, %53, %cst_64 {dimension_numbers = #tpu.dot_dimension_numbers<[1], [0], [0], [1], [0, 0, 1, 1], [], []>} : vector<8x128xbf16>, vector<128x512xbf16>, vector<8x512xf32> -> vector<8x512xf32>
    %287 = arith.addf %284, %286 : vector<8x512xf32>
    %288 = vector.extract_strided_slice %287 {offsets = [0, 0], sizes = [8, 384], strides = [1, 1]} : vector<8x512xf32> to vector<8x384xf32>
    %289 = arith.negf %288 : vector<8x384xf32>
    %290 = math.exp %289 : vector<8x384xf32>
    %cst_65 = arith.constant 1.000000e+00 : f32
    %291 = vector.broadcast %cst_65 : f32 to vector<8x384xf32>
    %292 = arith.addf %291, %290 : vector<8x384xf32>
    %293 = arith.divf %291, %292 : vector<8x384xf32>
    %294 = vector.extract_strided_slice %287 {offsets = [0, 384], sizes = [8, 128], strides = [1, 1]} : vector<8x512xf32> to vector<8x128xf32>
    %295 = math.tanh %294 : vector<8x128xf32>
    %296 = vector.extract_strided_slice %293 {offsets = [0, 0], sizes = [8, 128], strides = [1, 1]} : vector<8x384xf32> to vector<8x128xf32>
    %297 = vector.extract_strided_slice %293 {offsets = [0, 128], sizes = [8, 128], strides = [1, 1]} : vector<8x384xf32> to vector<8x128xf32>
    %298 = vector.extract_strided_slice %293 {offsets = [0, 256], sizes = [8, 128], strides = [1, 1]} : vector<8x384xf32> to vector<8x128xf32>
    %299 = arith.mulf %297, %280 : vector<8x128xf32>
    %300 = arith.mulf %296, %295 : vector<8x128xf32>
    %301 = arith.addf %299, %300 : vector<8x128xf32>
    %302 = math.tanh %301 : vector<8x128xf32>
    %303 = arith.mulf %298, %302 : vector<8x128xf32>
    %304 = arith.addi %54, %c7_i32 : i32
    %305 = vector.broadcast %304 : i32 to vector<8x1xi32>
    %306 = arith.cmpi slt, %305, %52 : vector<8x1xi32>
    %307 = vector.shape_cast %306 : vector<8x1xi1> to vector<8x1xi1>
    %308 = vector.broadcast %307 : vector<8x1xi1> to vector<8x128xi1>
    %309 = arith.select %308, %303, %277 : vector<8x128xi1>, vector<8x128xf32>
    %310 = vector.shape_cast %306 : vector<8x1xi1> to vector<8x1xi1>
    %311 = vector.broadcast %310 : vector<8x1xi1> to vector<8x128xi1>
    %312 = arith.select %311, %301, %280 : vector<8x128xi1>, vector<8x128xf32>
    %c8_i32_66 = arith.constant 8 : i32
    %c0_67 = arith.constant 0 : index
    %c0_68 = arith.constant 0 : index
    %313 = vector.load %arg16[%c0_67, %c0_68] : memref<8x128xf32, #tpu.memory_space<vmem>>, vector<8x128xf32>
    tpu.vector_store %arg16[%c0_67, %c0_68], %309 {strides = array<i32>} : memref<8x128xf32, #tpu.memory_space<vmem>>, vector<8x128xf32>,
    %c0_69 = arith.constant 0 : index
    %c0_70 = arith.constant 0 : index
    %314 = vector.load %arg17[%c0_69, %c0_70] : memref<8x128xf32, #tpu.memory_space<vmem>>, vector<8x128xf32>
    tpu.vector_store %arg17[%c0_69, %c0_70], %312 {strides = array<i32>} : memref<8x128xf32, #tpu.memory_space<vmem>>, vector<8x128xf32>,
    %c0_i32_71 = arith.constant 0 : i32
    %315 = arith.cmpi eq, %arg1, %c0_i32_71 : i32
    %316 = arith.extui %315 : i1 to i32
    %c0_i32_72 = arith.constant 0 : i32
    %317 = arith.cmpi ne, %316, %c0_i32_72 : i32
    scf.if %317 {
      %318 = tpu.iota {dimensions = array<i32: 1>} : vector<8x128xi32>
      %c32_i32_73 = arith.constant 32 : i32
      %319 = vector.broadcast %c32_i32_73 : i32 to vector<8x128xi32>
      %320 = arith.cmpi slt, %318, %319 : vector<8x128xi32>
      %321 = arith.extui %320 : vector<8x128xi1> to vector<8x128xi32>
      %322 = arith.sitofp %321 : vector<8x128xi32> to vector<8x128xf32>
      %cst_74 = arith.constant dense<0.000000e+00> : vector<8xf32>
      %323 = vector.multi_reduction <add>, %309, %cst_74 [1] : vector<8x128xf32> to vector<8xf32>
      %324 = vector.shape_cast %323 : vector<8xf32> to vector<8x1xf32>
      %cst_75 = arith.constant 3.125000e-02 : f32
      %325 = vector.broadcast %cst_75 : f32 to vector<8x1xf32>
      %326 = arith.mulf %324, %325 : vector<8x1xf32>
      %327 = vector.broadcast %326 : vector<8x1xf32> to vector<8x128xf32>
      %328 = arith.subf %309, %327 : vector<8x128xf32>
      %329 = arith.mulf %328, %322 : vector<8x128xf32>
      %330 = arith.mulf %329, %329 : vector<8x128xf32>
      %cst_76 = arith.constant dense<0.000000e+00> : vector<8xf32>
      %331 = vector.multi_reduction <add>, %330, %cst_76 [1] : vector<8x128xf32> to vector<8xf32>
      %332 = vector.shape_cast %331 : vector<8xf32> to vector<8x1xf32>
      %cst_77 = arith.constant 3.125000e-02 : f32
      %333 = vector.broadcast %cst_77 : f32 to vector<8x1xf32>
      %334 = arith.mulf %332, %333 : vector<8x1xf32>
      %cst_78 = arith.constant 9.99999974E-6 : f32
      %335 = vector.broadcast %cst_78 : f32 to vector<8x1xf32>
      %336 = arith.addf %334, %335 : vector<8x1xf32>
      %337 = math.rsqrt %336 : vector<8x1xf32>
      %338 = vector.broadcast %337 : vector<8x1xf32> to vector<8x128xf32>
      %339 = arith.mulf %329, %338 : vector<8x128xf32>
      %c0_79 = arith.constant 0 : index
      %c0_80 = arith.constant 0 : index
      %340 = vector.load %arg11[%c0_79, %c0_80] : memref<1x128xf32, #tpu.memory_space<vmem>>, vector<1x128xf32>
      %341 = vector.broadcast %340 : vector<1x128xf32> to vector<8x128xf32>
      %342 = arith.mulf %339, %341 : vector<8x128xf32>
      %c0_81 = arith.constant 0 : index
      %c0_82 = arith.constant 0 : index
      %343 = vector.load %arg12[%c0_81, %c0_82] : memref<1x128xf32, #tpu.memory_space<vmem>>, vector<1x128xf32>
      %344 = vector.broadcast %343 : vector<1x128xf32> to vector<8x128xf32>
      %345 = arith.addf %342, %344 : vector<8x128xf32>
      %346 = arith.truncf %345 : vector<8x128xf32> to vector<8x128xbf16>
      %c0_83 = arith.constant 0 : index
      %c0_84 = arith.constant 0 : index
      %347 = vector.load %arg13[%c0_83, %c0_84] : memref<128x128xbf16, #tpu.memory_space<vmem>>, vector<128x128xbf16>
      %cst_85 = arith.constant dense<0.000000e+00> : vector<8x128xf32>
      %348 = tpu.matmul %346, %347, %cst_85 {dimension_numbers = #tpu.dot_dimension_numbers<[1], [0], [0], [1], [0, 0, 1, 1], [], []>} : vector<8x128xbf16>, vector<128x128xbf16>, vector<8x128xf32> -> vector<8x128xf32>
      %c0_86 = arith.constant 0 : index
      %c0_87 = arith.constant 0 : index
      %349 = vector.load %arg14[%c0_86, %c0_87] : memref<1x128xf32, #tpu.memory_space<vmem>>, vector<1x128xf32>
      %350 = vector.broadcast %349 : vector<1x128xf32> to vector<8x128xf32>
      %351 = arith.addf %348, %350 : vector<8x128xf32>
      %352 = math.tanh %351 : vector<8x128xf32>
      %c0_88 = arith.constant 0 : index
      %c0_89 = arith.constant 0 : index
      %353 = vector.load %arg15[%c0_88, %c0_89] : memref<8x128xf32, #tpu.memory_space<vmem>>, vector<8x128xf32>
      tpu.vector_store %arg15[%c0_88, %c0_89], %352 {strides = array<i32>} : memref<8x128xf32, #tpu.memory_space<vmem>>, vector<8x128xf32>,
    } else {
    }
    return
  }
  func.func @transform_0(%arg0: i32, %arg1: i32) -> (i32, i32, i32) {
    %c0_i32 = arith.constant 0 : i32
    %c0_i32_0 = arith.constant 0 : i32
    return %arg1, %arg0, %c0_i32 : i32, i32, i32
  }
  func.func @transform_1(%arg0: i32, %arg1: i32) -> (i32, i32) {
    %c0_i32 = arith.constant 0 : i32
    %c0_i32_0 = arith.constant 0 : i32
    return %arg0, %c0_i32 : i32, i32
  }
  func.func @transform_2(%arg0: i32, %arg1: i32) -> (i32, i32) {
    %c0_i32 = arith.constant 0 : i32
    %c0_i32_0 = arith.constant 0 : i32
    %c0_i32_1 = arith.constant 0 : i32
    return %c0_i32, %c0_i32_0 : i32, i32
  }
  func.func @transform_3(%arg0: i32, %arg1: i32) -> (i32, i32) {
    %c0_i32 = arith.constant 0 : i32
    %c0_i32_0 = arith.constant 0 : i32
    %c0_i32_1 = arith.constant 0 : i32
    return %c0_i32, %c0_i32_0 : i32, i32
  }
  func.func @transform_4(%arg0: i32, %arg1: i32) -> (i32, i32) {
    %c0_i32 = arith.constant 0 : i32
    %c0_i32_0 = arith.constant 0 : i32
    %c0_i32_1 = arith.constant 0 : i32
    return %c0_i32, %c0_i32_0 : i32, i32
  }
  func.func @transform_5(%arg0: i32, %arg1: i32) -> (i32, i32) {
    %c0_i32 = arith.constant 0 : i32
    %c0_i32_0 = arith.constant 0 : i32
    %c0_i32_1 = arith.constant 0 : i32
    return %c0_i32, %c0_i32_0 : i32, i32
  }
  func.func @transform_6(%arg0: i32, %arg1: i32) -> (i32, i32) {
    %c0_i32 = arith.constant 0 : i32
    %c0_i32_0 = arith.constant 0 : i32
    %c0_i32_1 = arith.constant 0 : i32
    return %c0_i32, %c0_i32_0 : i32, i32
  }
  func.func @transform_7(%arg0: i32, %arg1: i32) -> (i32, i32) {
    %c0_i32 = arith.constant 0 : i32
    %c0_i32_0 = arith.constant 0 : i32
    %c0_i32_1 = arith.constant 0 : i32
    return %c0_i32, %c0_i32_0 : i32, i32
  }
  func.func @transform_8(%arg0: i32, %arg1: i32) -> (i32, i32) {
    %c0_i32 = arith.constant 0 : i32
    %c0_i32_0 = arith.constant 0 : i32
    %c0_i32_1 = arith.constant 0 : i32
    return %c0_i32, %c0_i32_0 : i32, i32
  }
  func.func @transform_9(%arg0: i32, %arg1: i32) -> (i32, i32) {
    %c0_i32 = arith.constant 0 : i32
    %c0_i32_0 = arith.constant 0 : i32
    %c0_i32_1 = arith.constant 0 : i32
    return %c0_i32, %c0_i32_0 : i32, i32
  }
  func.func @transform_10(%arg0: i32, %arg1: i32) -> (i32, i32) {
    %c0_i32 = arith.constant 0 : i32
    %c0_i32_0 = arith.constant 0 : i32
    %c0_i32_1 = arith.constant 0 : i32
    return %c0_i32, %c0_i32_0 : i32, i32
  }
  func.func @transform_11(%arg0: i32, %arg1: i32) -> (i32, i32) {
    %c0_i32 = arith.constant 0 : i32
    %c0_i32_0 = arith.constant 0 : i32
    %c0_i32_1 = arith.constant 0 : i32
    return %c0_i32, %c0_i32_0 : i32, i32
  }
  func.func @transform_12(%arg0: i32, %arg1: i32) -> (i32, i32) {
    %c0_i32 = arith.constant 0 : i32
    %c0_i32_0 = arith.constant 0 : i32
    %c0_i32_1 = arith.constant 0 : i32
    return %c0_i32, %c0_i32_0 : i32, i32
  }
  func.func @transform_13(%arg0: i32, %arg1: i32) -> (i32, i32) {
    %c0_i32 = arith.constant 0 : i32
    %c0_i32_0 = arith.constant 0 : i32
    return %arg0, %c0_i32 : i32, i32
  }
}

</mosaic_0001>

<llo_original>
// kernel: tpu_custom_call.1
$region0: #{tpu_custom_call.1}
  #allocation0 [shape = 'u32[]', space=smem, size = 0x4, offset = 0x4, fixed_abs, tag = 'smem constant byte address 0x4 - core index']
  #allocation1 [shape = 'u32[72,128]{1,0:T(1,128)}', space=vmem, size = 0x9000, scoped, tag = 'internal scratch']
  #allocation2 [shape = 'f32[8,128]{1,0:T(8,128)}', space=vmem, size = 0x1000, scoped, tag = 'scratch operand']
  #allocation3 [shape = 'f32[8,128]{1,0:T(8,128)}', space=vmem, size = 0x1000, scoped, tag = 'scratch operand']
  #allocation4 [shape = 'bf16[8,8,512]{2,1,0:T(8,128)(2,1)}', space=vmem, size = 0x10000, scoped, tag = 'scratch operand']
  %s0 = inlined_call_operand.hbm [shape: bf16[8,8,16], index: 0, kind: input, shape index: {}]
  %s1 = inlined_call_operand.vmem [shape: s32[8,1], index: 1, kind: input, shape index: {}]
  %s2 = inlined_call_operand.vmem [shape: bf16[16,128], index: 2, kind: input, shape index: {}]
  %s3 = inlined_call_operand.hbm [shape: f32[1,128], index: 3, kind: input, shape index: {}]
  %s4 = inlined_call_operand.hbm [shape: f32[1,128], index: 4, kind: input, shape index: {}]
  %s5 = inlined_call_operand.vmem [shape: f32[1,128], index: 5, kind: input, shape index: {}]
  %s6 = inlined_call_operand.hbm [shape: bf16[128,512], index: 6, kind: input, shape index: {}]
  %s7 = inlined_call_operand.hbm [shape: bf16[128,512], index: 7, kind: input, shape index: {}]
  %s8 = inlined_call_operand.vmem [shape: f32[1,512], index: 8, kind: input, shape index: {}]
  %s9 = inlined_call_operand.vmem [shape: f32[1,128], index: 9, kind: input, shape index: {}]
  %s10 = inlined_call_operand.vmem [shape: f32[1,128], index: 10, kind: input, shape index: {}]
  %s11 = inlined_call_operand.hbm [shape: bf16[128,128], index: 11, kind: input, shape index: {}]
  %s12 = inlined_call_operand.vmem [shape: f32[1,128], index: 12, kind: input, shape index: {}]
  %s13 = inlined_call_operand.hbm [shape: f32[8,128], index: 13, kind: output, shape index: {}]
  %s14 = sld [smem:[#allocation0]]
  $region94: #{tpu_custom_call.1} parent=0
    _
  %s16 = ssub.s32 1, %s14
  %s17 = scalar_select 0, %s16, %s14
  $region1: #{tpu_custom_call.1} parent=0
    #allocation5 [shape = 'u8[16384]{0}', space=vmem, size = 0x4000, scoped, tag = 'input window, operand 0, single buffered']
    #allocation6 [shape = 's32[1]{0}', space=sflag, size = 0x4, scoped, tag = 'scoped memory for tpu_custom_call.1']
    #allocation7 [shape = 's32[1]{0}', space=sflag, size = 0x4, scoped, tag = 'scoped memory for tpu_custom_call.1']
    #allocation8 [shape = 'u8[512]{0}', space=vmem, size = 0x400, scoped, tag = 'input window, operand 3, single buffered']
    #allocation9 [shape = 's32[1]{0}', space=sflag, size = 0x4, scoped, tag = 'scoped memory for tpu_custom_call.1']
    #allocation10 [shape = 'u8[512]{0}', space=vmem, size = 0x400, scoped, tag = 'input window, operand 4, single buffered']
    #allocation11 [shape = 'u8[131072]{0}', space=vmem, size = 0x20000, scoped, tag = 'input window, operand 6, single buffered']
    #allocation12 [shape = 's32[1]{0}', space=sflag, size = 0x4, scoped, tag = 'scoped memory for tpu_custom_call.1']
    #allocation13 [shape = 'u8[131072]{0}', space=vmem, size = 0x20000, scoped, tag = 'input window, operand 7, single buffered']
    #allocation14 [shape = 'u8[32768]{0}', space=vmem, size = 0x8000, scoped, tag = 'input window, operand 11, single buffered']
    #allocation15 [shape = 's32[1]{0}', space=sflag, size = 0x4, scoped, tag = 'scoped memory for tpu_custom_call.1']
    #allocation16 [shape = 'u8[4096]{0}', space=vmem, size = 0x1000, scoped, tag = 'output window, operand 0, single buffered']
    %18 = vsyncpa [#allocation6], 0
    %19 = vsyncpa [#allocation9], 0
    %20 = vsyncpa [#allocation12], 0
    %21 = vsyncpa [#allocation15], 0
    %22 = vsyncpa [#allocation7], 0
    // Predicated region
    $region2: #{tpu_custom_call.1} parent=1 // pred_check
      _
    $region3: #{tpu_custom_call.1} parent=1 // pred_check_branch
      %24 = sbr.rel (0) target = $region5
    $region4: #{tpu_custom_call.1} parent=1 // pred_region
      %26 = vsyncadd [#allocation6], 0
      %s27 = sshll.u32 %s0, 4
      %s28 = int_to_ptr.hbm [resolvable:$true] %s27
      %s29 = sshll.u32 [#allocation5], 4
      %s30 = int_to_ptr.vmem [resolvable:$true] %s29
      %35 = dma.hbm_to_vmem [thread:$0]  %s28, 512, %s30, [#allocation6], 64, 64, 4
    $region5: #{tpu_custom_call.1} parent=1 // pred_fallthru
      _
    // Predicated region
    $region6: #{tpu_custom_call.1} parent=1 // pred_check
      _
    $region7: #{tpu_custom_call.1} parent=1 // pred_check_branch
      %37 = sbr.rel (0) target = $region9
    $region8: #{tpu_custom_call.1} parent=1 // pred_region
      _
    $region9: #{tpu_custom_call.1} parent=1 // pred_fallthru
      _
    // Predicated region
    $region10: #{tpu_custom_call.1} parent=1 // pred_check
      _
    $region11: #{tpu_custom_call.1} parent=1 // pred_check_branch
      %39 = sbr.rel (0) target = $region13
    $region12: #{tpu_custom_call.1} parent=1 // pred_region
      _
    $region13: #{tpu_custom_call.1} parent=1 // pred_fallthru
      _
    // Predicated region
    $region14: #{tpu_custom_call.1} parent=1 // pred_check
      _
    $region15: #{tpu_custom_call.1} parent=1 // pred_check_branch
      %41 = sbr.rel (0) target = $region17
    $region16: #{tpu_custom_call.1} parent=1 // pred_region
      %43 = vsyncadd [#allocation9], 0
      %s45 = sshll.u32 %s3, 4
      %s46 = int_to_ptr.hbm [resolvable:$true] %s45
      %s47 = sshll.u32 [#allocation8], 4
      %s48 = int_to_ptr.vmem [resolvable:$true] %s47
      %50 = dma.hbm_to_vmem [thread:$0]  %s46, 16, %s48, [#allocation9]
    $region17: #{tpu_custom_call.1} parent=1 // pred_fallthru
      _
    // Predicated region
    $region18: #{tpu_custom_call.1} parent=1 // pred_check
      _
    $region19: #{tpu_custom_call.1} parent=1 // pred_check_branch
      %52 = sbr.rel (0) target = $region21
    $region20: #{tpu_custom_call.1} parent=1 // pred_region
      %54 = vsyncadd [#allocation9], 0
      %s56 = sshll.u32 %s4, 4
      %s57 = int_to_ptr.hbm [resolvable:$true] %s56
      %s58 = sshll.u32 [#allocation10], 4
      %s59 = int_to_ptr.vmem [resolvable:$true] %s58
      %61 = dma.hbm_to_vmem [thread:$0]  %s57, 16, %s59, [#allocation9]
    $region21: #{tpu_custom_call.1} parent=1 // pred_fallthru
      _
    // Predicated region
    $region22: #{tpu_custom_call.1} parent=1 // pred_check
      _
    $region23: #{tpu_custom_call.1} parent=1 // pred_check_branch
      %63 = sbr.rel (0) target = $region25
    $region24: #{tpu_custom_call.1} parent=1 // pred_region
      _
    $region25: #{tpu_custom_call.1} parent=1 // pred_fallthru
      _
    // Predicated region
    $region26: #{tpu_custom_call.1} parent=1 // pred_check
      _
    $region27: #{tpu_custom_call.1} parent=1 // pred_check_branch
      %65 = sbr.rel (0) target = $region29
    $region28: #{tpu_custom_call.1} parent=1 // pred_region
      %67 = vsyncadd [#allocation12], 0
      %s68 = sshll.u32 %s6, 4
      %s69 = int_to_ptr.hbm [resolvable:$true] %s68
      %s70 = sshll.u32 [#allocation11], 4
      %s71 = int_to_ptr.vmem [resolvable:$true] %s70
      %76 = dma.hbm_to_vmem [thread:$0]  %s69, 4096, %s71, [#allocation12], 256, 256, 16
    $region29: #{tpu_custom_call.1} parent=1 // pred_fallthru
      _
    // Predicated region
    $region30: #{tpu_custom_call.1} parent=1 // pred_check
      _
    $region31: #{tpu_custom_call.1} parent=1 // pred_check_branch
      %78 = sbr.rel (0) target = $region33
    $region32: #{tpu_custom_call.1} parent=1 // pred_region
      %80 = vsyncadd [#allocation12], 0
      %s81 = sshll.u32 %s7, 4
      %s82 = int_to_ptr.hbm [resolvable:$true] %s81
      %s83 = sshll.u32 [#allocation13], 4
      %s84 = int_to_ptr.vmem [resolvable:$true] %s83
      %89 = dma.hbm_to_vmem [thread:$0]  %s82, 4096, %s84, [#allocation12], 256, 256, 16
    $region33: #{tpu_custom_call.1} parent=1 // pred_fallthru
      _
    // Predicated region
    $region34: #{tpu_custom_call.1} parent=1 // pred_check
      _
    $region35: #{tpu_custom_call.1} parent=1 // pred_check_branch
      %91 = sbr.rel (0) target = $region37
    $region36: #{tpu_custom_call.1} parent=1 // pred_region
      _
    $region37: #{tpu_custom_call.1} parent=1 // pred_fallthru
      _
    // Predicated region
    $region38: #{tpu_custom_call.1} parent=1 // pred_check
      _
    $region39: #{tpu_custom_call.1} parent=1 // pred_check_branch
      %93 = sbr.rel (0) target = $region41
    $region40: #{tpu_custom_call.1} parent=1 // pred_region
      _
    $region41: #{tpu_custom_call.1} parent=1 // pred_fallthru
      _
    // Predicated region
    $region42: #{tpu_custom_call.1} parent=1 // pred_check
      _
    $region43: #{tpu_custom_call.1} parent=1 // pred_check_branch
      %95 = sbr.rel (0) target = $region45
    $region44: #{tpu_custom_call.1} parent=1 // pred_region
      _
    $region45: #{tpu_custom_call.1} parent=1 // pred_fallthru
      _
    // Predicated region
    $region46: #{tpu_custom_call.1} parent=1 // pred_check
      _
    $region47: #{tpu_custom_call.1} parent=1 // pred_check_branch
      %97 = sbr.rel (0) target = $region49
    $region48: #{tpu_custom_call.1} parent=1 // pred_region
      %99 = vsyncadd [#allocation15], 0
      %s100 = sshll.u32 %s11, 4
      %s101 = int_to_ptr.hbm [resolvable:$true] %s100
      %s102 = sshll.u32 [#allocation14], 4
      %s103 = int_to_ptr.vmem [resolvable:$true] %s102
      %108 = dma.hbm_to_vmem [thread:$0]  %s101, 1024, %s103, [#allocation15], 64, 64, 4
    $region49: #{tpu_custom_call.1} parent=1 // pred_fallthru
      _
    // Predicated region
    $region50: #{tpu_custom_call.1} parent=1 // pred_check
      _
    $region51: #{tpu_custom_call.1} parent=1 // pred_check_branch
      %110 = sbr.rel (0) target = $region53
    $region52: #{tpu_custom_call.1} parent=1 // pred_region
      _
    $region53: #{tpu_custom_call.1} parent=1 // pred_fallthru
      _
    // Predicated region
    $region54: #{tpu_custom_call.1} parent=1 // pred_check
      _
    $region55: #{tpu_custom_call.1} parent=1 // pred_check_branch
      %112 = sbr.rel (0) target = $region57
    $region56: #{tpu_custom_call.1} parent=1 // pred_region
      %114 = dma.done [#allocation6], 512
    $region57: #{tpu_custom_call.1} parent=1 // pred_fallthru
      _
    // Predicated region
    $region58: #{tpu_custom_call.1} parent=1 // pred_check
      _
    $region59: #{tpu_custom_call.1} parent=1 // pred_check_branch
      %116 = sbr.rel (0) target = $region61
    $region60: #{tpu_custom_call.1} parent=1 // pred_region
      %118 = dma.done [#allocation9], 16
    $region61: #{tpu_custom_call.1} parent=1 // pred_fallthru
      _
    // Predicated region
    $region62: #{tpu_custom_call.1} parent=1 // pred_check
      _
    $region63: #{tpu_custom_call.1} parent=1 // pred_check_branch
      %120 = sbr.rel (0) target = $region65
    $region64: #{tpu_custom_call.1} parent=1 // pred_region
      %122 = dma.done [#allocation9], 16
    $region65: #{tpu_custom_call.1} parent=1 // pred_fallthru
      _
    // Predicated region
    $region66: #{tpu_custom_call.1} parent=1 // pred_check
      _
    $region67: #{tpu_custom_call.1} parent=1 // pred_check_branch
      %124 = sbr.rel (0) target = $region69
    $region68: #{tpu_custom_call.1} parent=1 // pred_region
      %126 = dma.done [#allocation12], 4096
    $region69: #{tpu_custom_call.1} parent=1 // pred_fallthru
      _
    // Predicated region
    $region70: #{tpu_custom_call.1} parent=1 // pred_check
      _
    $region71: #{tpu_custom_call.1} parent=1 // pred_check_branch
      %128 = sbr.rel (0) target = $region73
    $region72: #{tpu_custom_call.1} parent=1 // pred_region
      %130 = dma.done [#allocation12], 4096
    $region73: #{tpu_custom_call.1} parent=1 // pred_fallthru
      _
    // Predicated region
    $region74: #{tpu_custom_call.1} parent=1 // pred_check
      _
    $region75: #{tpu_custom_call.1} parent=1 // pred_check_branch
      %132 = sbr.rel (0) target = $region77
    $region76: #{tpu_custom_call.1} parent=1 // pred_region
      %134 = dma.done [#allocation15], 1024
    $region77: #{tpu_custom_call.1} parent=1 // pred_fallthru
      _
    %p136 = scmp.eq.s32.totalorder 0, 0
    // Predicated region
    $region78: #{tpu_custom_call.1} parent=1 // pred_check
      %p137 = pneg %p136
    $region79: #{tpu_custom_call.1} parent=1 // pred_check_branch
      %139 = sbr.rel (%p137) target = $region81
    $region80: #{tpu_custom_call.1} parent=1 // pred_region
      %140 = vst [vmem:[#allocation2] sm:$0xff] 0.0
      %141 = vst [vmem:[#allocation3] sm:$0xff] 0.0
    $region81: #{tpu_custom_call.1} parent=1 // pred_fallthru
      _
    %v142 = vld [vmem:[#allocation5] sm:$0xf]
    %v143 = vld [vmem:[#allocation5 + $0x4] sm:$0xf]
    %v144 = vld [vmem:[#allocation5 + $0x8] sm:$0xf]
    %v145 = vld [vmem:[#allocation5 + $0xc] sm:$0xf]
    %v146 = vld [vmem:[#allocation5 + $0x10] sm:$0xf]
    %v147 = vld [vmem:[#allocation5 + $0x14] sm:$0xf]
    %v148 = vld [vmem:[#allocation5 + $0x18] sm:$0xf]
    %v149 = vld [vmem:[#allocation5 + $0x1c] sm:$0xf]
    %v150 = vld [vmem:[%s2] sm:$0xf]
    %v151 = vld [vmem:[%s2 + $0x4] sm:$0xf]
    %v152 = vld [vmem:[#allocation8] sm:$0x1]
    %v154 = vperm.slane %v152, 0
    %v164 = vunpack.c.l.b16 %v142
    %v165 = vunpack.c.l.b16 %v143
    %v166 = vunpack.c.l.b16 %v144
    %v167 = vunpack.c.l.b16 %v145
    %v168 = vunpack.c.l.b16 %v146
    %v169 = vunpack.c.l.b16 %v147
    %v170 = vunpack.c.l.b16 %v148
    %v171 = vunpack.c.l.b16 %v149
    %v172 = vpack.c.b16 %v165, %v164
    %v173 = vpack.c.b16 %v167, %v166
    %v174 = vpack.c.b16 %v169, %v168
    %v175 = vpack.c.b16 %v171, %v170
    %v178 = vunpack.c.l.b16 %v150
    %v179 = vunpack.c.l.b16 %v151
    %v180 = vpack.c.b16 %v179, %v178
    %vm182 = vcmask 130048
    %v184 = vsel %vm182, %v172, 0
    %v187 = vsel %vm182, %v173, 0
    %v190 = vsel %vm182, %v174, 0
    %v193 = vsel %vm182, %v175, 0
    %195 = vmatpush.bf16.msra.mxu0 0
    %196 = vmatpush.bf16.msra.mxu0 0
    %197 = vmatpush.bf16.msra.mxu0 0
    %198 = vmatpush.bf16.msra.mxu0 0
    %199 = vmatpush.bf16.msra.mxu0 0
    %200 = vmatpush.bf16.msra.mxu0 0
    %201 = vmatpush.bf16.msra.mxu0 0
    %202 = vmatpush.bf16.msra.mxu0 %v180
    %203 = vmatmul.bf16.gmra.mxu0 %v184
    %v204 = vpop.f32.mrf.mxu0
    %v205 = vadd.f32 %v154, %v204
    %v206 = vpop.f32.mrf.mxu0
    %v207 = vadd.f32 %v154, %v206
    %208 = vmatmul.bf16.gmra.mxu0 %v187
    %v209 = vpop.f32.mrf.mxu0
    %v210 = vadd.f32 %v154, %v209
    %v211 = vpop.f32.mrf.mxu0
    %v212 = vadd.f32 %v154, %v211
    %213 = vmatmul.bf16.gmra.mxu0 %v190
    %v214 = vpop.f32.mrf.mxu0
    %v215 = vadd.f32 %v154, %v214
    %v216 = vpop.f32.mrf.mxu0
    %v217 = vadd.f32 %v154, %v216
    %218 = vmatmul.bf16.gmra.mxu0 %v193
    %v219 = vpop.f32.mrf.mxu0
    %v220 = vadd.f32 %v154, %v219
    %v221 = vpop.f32.mrf.mxu0
    %v222 = vadd.f32 %v154, %v221
    %223 = vdwg.mxu0
    %v224 = vlaneseq
    %v225 = vand.u32 %v224, 127
    %vm226 = vcmp.lt.s32.totalorder %v225, 32
    %v227 = vsel %vm226, 1, 0
    %v228 = vcvt.s32.f32 %v227
    %229 = vadd.xlane.f32.xlu0 %v205
    %v230 = vpop.xlane.xlu0 %229
    %231 = vadd.xlane.f32.xlu0 %v207
    %v232 = vpop.xlane.xlu0 %231
    %233 = vadd.xlane.f32.xlu0 %v210
    %v234 = vpop.xlane.xlu0 %233
    %235 = vadd.xlane.f32.xlu0 %v212
    %v236 = vpop.xlane.xlu0 %235
    %237 = vadd.xlane.f32.xlu0 %v215
    %v238 = vpop.xlane.xlu0 %237
    %239 = vadd.xlane.f32.xlu0 %v217
    %v240 = vpop.xlane.xlu0 %239
    %241 = vadd.xlane.f32.xlu0 %v220
    %v242 = vpop.xlane.xlu0 %241
    %243 = vadd.xlane.f32.xlu0 %v222
    %v244 = vpop.xlane.xlu0 %243
    %v245 = vmul.f32 %v230, 0.03125
    %v246 = vmul.f32 %v232, 0.03125
    %v247 = vmul.f32 %v234, 0.03125
    %v248 = vmul.f32 %v236, 0.03125
    %v249 = vmul.f32 %v238, 0.03125
    %v250 = vmul.f32 %v240, 0.03125
    %v251 = vmul.f32 %v242, 0.03125
    %v252 = vmul.f32 %v244, 0.03125
    %v253 = vsub.f32 %v205, %v245
    %v254 = vsub.f32 %v207, %v246
    %v255 = vsub.f32 %v210, %v247
    %v256 = vsub.f32 %v212, %v248
    %v257 = vsub.f32 %v215, %v249
    %v258 = vsub.f32 %v217, %v250
    %v259 = vsub.f32 %v220, %v251
    %v260 = vsub.f32 %v222, %v252
    %v261 = vmul.f32 %v253, %v228
    %v262 = vmul.f32 %v254, %v228
    %v263 = vmul.f32 %v255, %v228
    %v264 = vmul.f32 %v256, %v228
    %v265 = vmul.f32 %v257, %v228
    %v266 = vmul.f32 %v258, %v228
    %v267 = vmul.f32 %v259, %v228
    %v268 = vmul.f32 %v260, %v228
    %v269 = vmul.f32 %v261, %v261
    %v270 = vmul.f32 %v262, %v262
    %v271 = vmul.f32 %v263, %v263
    %v272 = vmul.f32 %v264, %v264
    %v273 = vmul.f32 %v265, %v265
    %v274 = vmul.f32 %v266, %v266
    %v275 = vmul.f32 %v267, %v267
    %v276 = vmul.f32 %v268, %v268
    %277 = vadd.xlane.f32.xlu0 %v269
    %v278 = vpop.xlane.xlu0 %277
    %279 = vadd.xlane.f32.xlu0 %v270
    %v280 = vpop.xlane.xlu0 %279
    %281 = vadd.xlane.f32.xlu0 %v271
    %v282 = vpop.xlane.xlu0 %281
    %283 = vadd.xlane.f32.xlu0 %v272
    %v284 = vpop.xlane.xlu0 %283
    %285 = vadd.xlane.f32.xlu0 %v273
    %v286 = vpop.xlane.xlu0 %285
    %287 = vadd.xlane.f32.xlu0 %v274
    %v288 = vpop.xlane.xlu0 %287
    %289 = vadd.xlane.f32.xlu0 %v275
    %v290 = vpop.xlane.xlu0 %289
    %291 = vadd.xlane.f32.xlu0 %v276
    %v292 = vpop.xlane.xlu0 %291
    %v293 = vmul.f32 %v278, 0.03125
    %v294 = vmul.f32 %v280, 0.03125
    %v295 = vmul.f32 %v282, 0.03125
    %v296 = vmul.f32 %v284, 0.03125
    %v297 = vmul.f32 %v286, 0.03125
    %v298 = vmul.f32 %v288, 0.03125
    %v299 = vmul.f32 %v290, 0.03125
    %v300 = vmul.f32 %v292, 0.03125
    %v301 = vadd.f32 %v293, 1e-05
    %v302 = vadd.f32 %v294, 1e-05
    %v303 = vadd.f32 %v295, 1e-05
    %v304 = vadd.f32 %v296, 1e-05
    %v305 = vadd.f32 %v297, 1e-05
    %v306 = vadd.f32 %v298, 1e-05
    %v307 = vadd.f32 %v299, 1e-05
    %v308 = vadd.f32 %v300, 1e-05
    %v309 = vrsqrt.pop %v301
    %v310 = vmul.f32 %v309, %v301
    %v311 = vmul.f32 %v310, %v309
    %v312 = vmul.f32 0.5, %v311
    %v313 = vsub.f32 1.5, %v312
    %v314 = vmul.f32 %v309, %v313
    %vm315 = vweird.f32 %v301
    %vm316 = vweird.f32 %v309
    %vm317 = vmor %vm315, %vm316
    %v318 = vsel %vm317, %v309, %v314
    %v319 = vrsqrt.pop %v302
    %v320 = vmul.f32 %v319, %v302
    %v321 = vmul.f32 %v320, %v319
    %v322 = vmul.f32 0.5, %v321
    %v323 = vsub.f32 1.5, %v322
    %v324 = vmul.f32 %v319, %v323
    %vm325 = vweird.f32 %v302
    %vm326 = vweird.f32 %v319
    %vm327 = vmor %vm325, %vm326
    %v328 = vsel %vm327, %v319, %v324
    %v329 = vrsqrt.pop %v303
    %v330 = vmul.f32 %v329, %v303
    %v331 = vmul.f32 %v330, %v329
    %v332 = vmul.f32 0.5, %v331
    %v333 = vsub.f32 1.5, %v332
    %v334 = vmul.f32 %v329, %v333
    %vm335 = vweird.f32 %v303
    %vm336 = vweird.f32 %v329
    %vm337 = vmor %vm335, %vm336
    %v338 = vsel %vm337, %v329, %v334
    %v339 = vrsqrt.pop %v304
    %v340 = vmul.f32 %v339, %v304
    %v341 = vmul.f32 %v340, %v339
    %v342 = vmul.f32 0.5, %v341
    %v343 = vsub.f32 1.5, %v342
    %v344 = vmul.f32 %v339, %v343
    %vm345 = vweird.f32 %v304
    %vm346 = vweird.f32 %v339
    %vm347 = vmor %vm345, %vm346
    %v348 = vsel %vm347, %v339, %v344
    %v349 = vrsqrt.pop %v305
    %v350 = vmul.f32 %v349, %v305
    %v351 = vmul.f32 %v350, %v349
    %v352 = vmul.f32 0.5, %v351
    %v353 = vsub.f32 1.5, %v352
    %v354 = vmul.f32 %v349, %v353
    %vm355 = vweird.f32 %v305
    %vm356 = vweird.f32 %v349
    %vm357 = vmor %vm355, %vm356
    %v358 = vsel %vm357, %v349, %v354
    %v359 = vrsqrt.pop %v306
    %v360 = vmul.f32 %v359, %v306
    %v361 = vmul.f32 %v360, %v359
    %v362 = vmul.f32 0.5, %v361
    %v363 = vsub.f32 1.5, %v362
    %v364 = vmul.f32 %v359, %v363
    %vm365 = vweird.f32 %v306
    %vm366 = vweird.f32 %v359
    %vm367 = vmor %vm365, %vm366
    %v368 = vsel %vm367, %v359, %v364
    %v369 = vrsqrt.pop %v307
    %v370 = vmul.f32 %v369, %v307
    %v371 = vmul.f32 %v370, %v369
    %v372 = vmul.f32 0.5, %v371
    %v373 = vsub.f32 1.5, %v372
    %v374 = vmul.f32 %v369, %v373
    %vm375 = vweird.f32 %v307
    %vm376 = vweird.f32 %v369
    %vm377 = vmor %vm375, %vm376
    %v378 = vsel %vm377, %v369, %v374
    %v379 = vrsqrt.pop %v308
    %v380 = vmul.f32 %v379, %v308
    %v381 = vmul.f32 %v380, %v379
    %v382 = vmul.f32 0.5, %v381
    %v383 = vsub.f32 1.5, %v382
    %v384 = vmul.f32 %v379, %v383
    %vm385 = vweird.f32 %v308
    %vm386 = vweird.f32 %v379
    %vm387 = vmor %vm385, %vm386
    %v388 = vsel %vm387, %v379, %v384
    %v389 = vmul.f32 %v261, %v318
    %v390 = vmul.f32 %v262, %v328
    %v391 = vmul.f32 %v263, %v338
    %v392 = vmul.f32 %v264, %v348
    %v393 = vmul.f32 %v265, %v358
    %v394 = vmul.f32 %v266, %v368
    %v395 = vmul.f32 %v267, %v378
    %v396 = vmul.f32 %v268, %v388
    %v397 = vld [vmem:[#allocation10] sm:$0x1]
    %v399 = vperm.slane %v397, 0
    %v401 = vmul.f32 %v389, %v399
    %v402 = vmul.f32 %v390, %v399
    %v403 = vmul.f32 %v391, %v399
    %v404 = vmul.f32 %v392, %v399
    %v405 = vmul.f32 %v393, %v399
    %v406 = vmul.f32 %v394, %v399
    %v407 = vmul.f32 %v395, %v399
    %v408 = vmul.f32 %v396, %v399
    %v409 = vld [vmem:[%s5] sm:$0x1]
    %v411 = vperm.slane %v409, 0
    %v413 = vadd.f32 %v401, %v411
    %v414 = vadd.f32 %v402, %v411
    %v415 = vadd.f32 %v403, %v411
    %v416 = vadd.f32 %v404, %v411
    %v417 = vadd.f32 %v405, %v411
    %v418 = vadd.f32 %v406, %v411
    %v419 = vadd.f32 %v407, %v411
    %v420 = vadd.f32 %v408, %v411
    %v421 = vtanh.pop %v413
    %v422 = vtanh.pop %v414
    %v423 = vtanh.pop %v415
    %v424 = vtanh.pop %v416
    %v425 = vtanh.pop %v417
    %v426 = vtanh.pop %v418
    %v427 = vtanh.pop %v419
    %v428 = vtanh.pop %v420
    %v429 = vpack.c.bf16 %v422, %v421
    %v430 = vpack.c.bf16 %v424, %v423
    %v431 = vpack.c.bf16 %v426, %v425
    %v432 = vpack.c.bf16 %v428, %v427
    %v433 = vld [vmem:[#allocation11] sm:$0xff]
    %v434 = vld [vmem:[#allocation11 + $0x8] sm:$0xff]
    %v435 = vld [vmem:[#allocation11 + $0x10] sm:$0xff]
    %v436 = vld [vmem:[#allocation11 + $0x18] sm:$0xff]
    %v437 = vld [vmem:[#allocation11 + $0x20] sm:$0xff]
    %v438 = vld [vmem:[#allocation11 + $0x28] sm:$0xff]
    %v439 = vld [vmem:[#allocation11 + $0x30] sm:$0xff]
    %v440 = vld [vmem:[#allocation11 + $0x38] sm:$0xff]
    %v441 = vld [vmem:[#allocation11 + $0x40] sm:$0xff]
    %v442 = vld [vmem:[#allocation11 + $0x48] sm:$0xff]
    %v443 = vld [vmem:[#allocation11 + $0x50] sm:$0xff]
    %v444 = vld [vmem:[#allocation11 + $0x58] sm:$0xff]
    %v445 = vld [vmem:[#allocation11 + $0x60] sm:$0xff]
    %v446 = vld [vmem:[#allocation11 + $0x68] sm:$0xff]
    %v447 = vld [vmem:[#allocation11 + $0x70] sm:$0xff]
    %v448 = vld [vmem:[#allocation11 + $0x78] sm:$0xff]
    %v449 = vld [vmem:[#allocation11 + $0x80] sm:$0xff]
    %v450 = vld [vmem:[#allocation11 + $0x88] sm:$0xff]
    %v451 = vld [vmem:[#allocation11 + $0x90] sm:$0xff]
    %v452 = vld [vmem:[#allocation11 + $0x98] sm:$0xff]
    %v453 = vld [vmem:[#allocation11 + $0xa0] sm:$0xff]
    %v454 = vld [vmem:[#allocation11 + $0xa8] sm:$0xff]
    %v455 = vld [vmem:[#allocation11 + $0xb0] sm:$0xff]
    %v456 = vld [vmem:[#allocation11 + $0xb8] sm:$0xff]
    %v457 = vld [vmem:[#allocation11 + $0xc0] sm:$0xff]
    %v458 = vld [vmem:[#allocation11 + $0xc8] sm:$0xff]
    %v459 = vld [vmem:[#allocation11 + $0xd0] sm:$0xff]
    %v460 = vld [vmem:[#allocation11 + $0xd8] sm:$0xff]
    %v461 = vld [vmem:[#allocation11 + $0xe0] sm:$0xff]
    %v462 = vld [vmem:[#allocation11 + $0xe8] sm:$0xff]
    %v463 = vld [vmem:[#allocation11 + $0xf0] sm:$0xff]
    %v464 = vld [vmem:[#allocation11 + $0xf8] sm:$0xff]
    %v465 = vld [vmem:[%s8] sm:$0xf]
    %v467 = vperm.slane %v465, 0
    %v468 = vperm.slane %v465, 1
    %v469 = vperm.slane %v465, 2
    %v470 = vperm.slane %v465, 3
    %v507 = vunpack.c.l.b16 %v433
    %v508 = vunpack.c.h.b16 %v433
    %v509 = vunpack.c.l.b16 %v434
    %v510 = vunpack.c.h.b16 %v434
    %v511 = vunpack.c.l.b16 %v435
    %v512 = vunpack.c.h.b16 %v435
    %v513 = vunpack.c.l.b16 %v436
    %v514 = vunpack.c.h.b16 %v436
    %v515 = vunpack.c.l.b16 %v437
    %v516 = vunpack.c.h.b16 %v437
    %v517 = vunpack.c.l.b16 %v438
    %v518 = vunpack.c.h.b16 %v438
    %v519 = vunpack.c.l.b16 %v439
    %v520 = vunpack.c.h.b16 %v439
    %v521 = vunpack.c.l.b16 %v440
    %v522 = vunpack.c.h.b16 %v440
    %v523 = vunpack.c.l.b16 %v441
    %v524 = vunpack.c.h.b16 %v441
    %v525 = vunpack.c.l.b16 %v442
    %v526 = vunpack.c.h.b16 %v442
    %v527 = vunpack.c.l.b16 %v443
    %v528 = vunpack.c.h.b16 %v443
    %v529 = vunpack.c.l.b16 %v444
    %v530 = vunpack.c.h.b16 %v444
    %v531 = vunpack.c.l.b16 %v445
    %v532 = vunpack.c.h.b16 %v445
    %v533 = vunpack.c.l.b16 %v446
    %v534 = vunpack.c.h.b16 %v446
    %v535 = vunpack.c.l.b16 %v447
    %v536 = vunpack.c.h.b16 %v447
    %v537 = vunpack.c.l.b16 %v448
    %v538 = vunpack.c.h.b16 %v448
    %v539 = vunpack.c.l.b16 %v449
    %v540 = vunpack.c.h.b16 %v449
    %v541 = vunpack.c.l.b16 %v450
    %v542 = vunpack.c.h.b16 %v450
    %v543 = vunpack.c.l.b16 %v451
    %v544 = vunpack.c.h.b16 %v451
    %v545 = vunpack.c.l.b16 %v452
    %v546 = vunpack.c.h.b16 %v452
    %v547 = vunpack.c.l.b16 %v453
    %v548 = vunpack.c.h.b16 %v453
    %v549 = vunpack.c.l.b16 %v454
    %v550 = vunpack.c.h.b16 %v454
    %v551 = vunpack.c.l.b16 %v455
    %v552 = vunpack.c.h.b16 %v455
    %v553 = vunpack.c.l.b16 %v456
    %v554 = vunpack.c.h.b16 %v456
    %v555 = vunpack.c.l.b16 %v457
    %v556 = vunpack.c.h.b16 %v457
    %v557 = vunpack.c.l.b16 %v458
    %v558 = vunpack.c.h.b16 %v458
    %v559 = vunpack.c.l.b16 %v459
    %v560 = vunpack.c.h.b16 %v459
    %v561 = vunpack.c.l.b16 %v460
    %v562 = vunpack.c.h.b16 %v460
    %v563 = vunpack.c.l.b16 %v461
    %v564 = vunpack.c.h.b16 %v461
    %v565 = vunpack.c.l.b16 %v462
    %v566 = vunpack.c.h.b16 %v462
    %v567 = vunpack.c.l.b16 %v463
    %v568 = vunpack.c.h.b16 %v463
    %v569 = vunpack.c.l.b16 %v464
    %v570 = vunpack.c.h.b16 %v464
    %v571 = vpack.c.b16 %v511, %v507
    %v572 = vpack.c.b16 %v512, %v508
    %v573 = vpack.c.b16 %v513, %v509
    %v574 = vpack.c.b16 %v514, %v510
    %v575 = vpack.c.b16 %v519, %v515
    %v576 = vpack.c.b16 %v520, %v516
    %v577 = vpack.c.b16 %v521, %v517
    %v578 = vpack.c.b16 %v522, %v518
    %v579 = vpack.c.b16 %v527, %v523
    %v580 = vpack.c.b16 %v528, %v524
    %v581 = vpack.c.b16 %v529, %v525
    %v582 = vpack.c.b16 %v530, %v526
    %v583 = vpack.c.b16 %v535, %v531
    %v584 = vpack.c.b16 %v536, %v532
    %v585 = vpack.c.b16 %v537, %v533
    %v586 = vpack.c.b16 %v538, %v534
    %v587 = vpack.c.b16 %v543, %v539
    %v588 = vpack.c.b16 %v544, %v540
    %v589 = vpack.c.b16 %v545, %v541
    %v590 = vpack.c.b16 %v546, %v542
    %v591 = vpack.c.b16 %v551, %v547
    %v592 = vpack.c.b16 %v552, %v548
    %v593 = vpack.c.b16 %v553, %v549
    %v594 = vpack.c.b16 %v554, %v550
    %v595 = vpack.c.b16 %v559, %v555
    %v596 = vpack.c.b16 %v560, %v556
    %v597 = vpack.c.b16 %v561, %v557
    %v598 = vpack.c.b16 %v562, %v558
    %v599 = vpack.c.b16 %v567, %v563
    %v600 = vpack.c.b16 %v568, %v564
    %v601 = vpack.c.b16 %v569, %v565
    %v602 = vpack.c.b16 %v570, %v566
    %635 = vmatpush.bf16.msra.mxu0 %v599
    %636 = vmatpush.bf16.msra.mxu0 %v595
    %637 = vmatpush.bf16.msra.mxu0 %v591
    %638 = vmatpush.bf16.msra.mxu0 %v587
    %639 = vmatpush.bf16.msra.mxu0 %v583
    %640 = vmatpush.bf16.msra.mxu0 %v579
    %641 = vmatpush.bf16.msra.mxu0 %v575
    %642 = vmatpush.bf16.msra.mxu0 %v571
    %643 = vmatmul.bf16.gmra.mxu0 %v429
    %v644 = vpop.f32.mrf.mxu0
    %v645 = vadd.f32 %v467, %v644
    %v646 = vpop.f32.mrf.mxu0
    %v647 = vadd.f32 %v467, %v646
    %648 = vmatmul.bf16.gmra.mxu0 %v430
    %v649 = vpop.f32.mrf.mxu0
    %v650 = vadd.f32 %v467, %v649
    %v651 = vpop.f32.mrf.mxu0
    %v652 = vadd.f32 %v467, %v651
    %653 = vmatmul.bf16.gmra.mxu0 %v431
    %v654 = vpop.f32.mrf.mxu0
    %v655 = vadd.f32 %v467, %v654
    %v656 = vpop.f32.mrf.mxu0
    %v657 = vadd.f32 %v467, %v656
    %658 = vmatmul.bf16.gmra.mxu0 %v432
    %v659 = vpop.f32.mrf.mxu0
    %v660 = vadd.f32 %v467, %v659
    %v661 = vpop.f32.mrf.mxu0
    %v662 = vadd.f32 %v467, %v661
    %663 = vdwg.mxu0
    %664 = vmatpush.bf16.msra.mxu0 %v600
    %665 = vmatpush.bf16.msra.mxu0 %v596
    %666 = vmatpush.bf16.msra.mxu0 %v592
    %667 = vmatpush.bf16.msra.mxu0 %v588
    %668 = vmatpush.bf16.msra.mxu0 %v584
    %669 = vmatpush.bf16.msra.mxu0 %v580
    %670 = vmatpush.bf16.msra.mxu0 %v576
    %671 = vmatpush.bf16.msra.mxu0 %v572
    %672 = vmatmul.bf16.gmra.mxu0 %v429
    %v673 = vpop.f32.mrf.mxu0
    %v674 = vadd.f32 %v468, %v673
    %v675 = vpop.f32.mrf.mxu0
    %v676 = vadd.f32 %v468, %v675
    %677 = vmatmul.bf16.gmra.mxu0 %v430
    %v678 = vpop.f32.mrf.mxu0
    %v679 = vadd.f32 %v468, %v678
    %v680 = vpop.f32.mrf.mxu0
    %v681 = vadd.f32 %v468, %v680
    %682 = vmatmul.bf16.gmra.mxu0 %v431
    %v683 = vpop.f32.mrf.mxu0
    %v684 = vadd.f32 %v468, %v683
    %v685 = vpop.f32.mrf.mxu0
    %v686 = vadd.f32 %v468, %v685
    %687 = vmatmul.bf16.gmra.mxu0 %v432
    %v688 = vpop.f32.mrf.mxu0
    %v689 = vadd.f32 %v468, %v688
    %v690 = vpop.f32.mrf.mxu0
    %v691 = vadd.f32 %v468, %v690
    %692 = vdwg.mxu0
    %693 = vmatpush.bf16.msra.mxu0 %v601
    %694 = vmatpush.bf16.msra.mxu0 %v597
    %695 = vmatpush.bf16.msra.mxu0 %v593
    %696 = vmatpush.bf16.msra.mxu0 %v589
    %697 = vmatpush.bf16.msra.mxu0 %v585
    %698 = vmatpush.bf16.msra.mxu0 %v581
    %699 = vmatpush.bf16.msra.mxu0 %v577
    %700 = vmatpush.bf16.msra.mxu0 %v573
    %701 = vmatmul.bf16.gmra.mxu0 %v429
    %v702 = vpop.f32.mrf.mxu0
    %v703 = vadd.f32 %v469, %v702
    %v704 = vpop.f32.mrf.mxu0
    %v705 = vadd.f32 %v469, %v704
    %706 = vmatmul.bf16.gmra.mxu0 %v430
    %v707 = vpop.f32.mrf.mxu0
    %v708 = vadd.f32 %v469, %v707
    %v709 = vpop.f32.mrf.mxu0
    %v710 = vadd.f32 %v469, %v709
    %711 = vmatmul.bf16.gmra.mxu0 %v431
    %v712 = vpop.f32.mrf.mxu0
    %v713 = vadd.f32 %v469, %v712
    %v714 = vpop.f32.mrf.mxu0
    %v715 = vadd.f32 %v469, %v714
    %716 = vmatmul.bf16.gmra.mxu0 %v432
    %v717 = vpop.f32.mrf.mxu0
    %v718 = vadd.f32 %v469, %v717
    %v719 = vpop.f32.mrf.mxu0
    %v720 = vadd.f32 %v469, %v719
    %721 = vdwg.mxu0
    %722 = vmatpush.bf16.msra.mxu0 %v602
    %723 = vmatpush.bf16.msra.mxu0 %v598
    %724 = vmatpush.bf16.msra.mxu0 %v594
    %725 = vmatpush.bf16.msra.mxu0 %v590
    %726 = vmatpush.bf16.msra.mxu0 %v586
    %727 = vmatpush.bf16.msra.mxu0 %v582
    %728 = vmatpush.bf16.msra.mxu0 %v578
    %729 = vmatpush.bf16.msra.mxu0 %v574
    %730 = vmatmul.bf16.gmra.mxu0 %v429
    %v731 = vpop.f32.mrf.mxu0
    %v732 = vadd.f32 %v470, %v731
    %v733 = vpop.f32.mrf.mxu0
    %v734 = vadd.f32 %v470, %v733
    %735 = vmatmul.bf16.gmra.mxu0 %v430
    %v736 = vpop.f32.mrf.mxu0
    %v737 = vadd.f32 %v470, %v736
    %v738 = vpop.f32.mrf.mxu0
    %v739 = vadd.f32 %v470, %v738
    %740 = vmatmul.bf16.gmra.mxu0 %v431
    %v741 = vpop.f32.mrf.mxu0
    %v742 = vadd.f32 %v470, %v741
    %v743 = vpop.f32.mrf.mxu0
    %v744 = vadd.f32 %v470, %v743
    %745 = vmatmul.bf16.gmra.mxu0 %v432
    %v746 = vpop.f32.mrf.mxu0
    %v747 = vadd.f32 %v470, %v746
    %v748 = vpop.f32.mrf.mxu0
    %v749 = vadd.f32 %v470, %v748
    %750 = vdwg.mxu0
    %v751 = vpack.c.bf16 %v674, %v645
    %v752 = vpack.c.bf16 %v732, %v703
    %v753 = vpack.c.bf16 %v676, %v647
    %v754 = vpack.c.bf16 %v734, %v705
    %v755 = vpack.c.bf16 %v679, %v650
    %v756 = vpack.c.bf16 %v737, %v708
    %v757 = vpack.c.bf16 %v681, %v652
    %v758 = vpack.c.bf16 %v739, %v710
    %v759 = vpack.c.bf16 %v684, %v655
    %v760 = vpack.c.bf16 %v742, %v713
    %v761 = vpack.c.bf16 %v686, %v657
    %v762 = vpack.c.bf16 %v744, %v715
    %v763 = vpack.c.bf16 %v689, %v660
    %v764 = vpack.c.bf16 %v747, %v718
    %v765 = vpack.c.bf16 %v691, %v662
    %v766 = vpack.c.bf16 %v749, %v720
    %s767 = smul.u32 0, 4
    %s768 = smul.addr %s767, 4
    %s769 = scalar_lea.vmem [#allocation4], %s768
    %770 = vst [vmem:[%s769] sm:$0xff] %v751
    %771 = vst [vmem:[%s769 + $0x8] sm:$0xff] %v752
    %772 = vst [vmem:[%s769 + $0x10] sm:$0xff] %v753
    %773 = vst [vmem:[%s769 + $0x18] sm:$0xff] %v754
    %774 = vst [vmem:[%s769 + $0x20] sm:$0xff] %v755
    %775 = vst [vmem:[%s769 + $0x28] sm:$0xff] %v756
    %776 = vst [vmem:[%s769 + $0x30] sm:$0xff] %v757
    %777 = vst [vmem:[%s769 + $0x38] sm:$0xff] %v758
    %778 = vst [vmem:[%s769 + $0x40] sm:$0xff] %v759
    %779 = vst [vmem:[%s769 + $0x48] sm:$0xff] %v760
    %780 = vst [vmem:[%s769 + $0x50] sm:$0xff] %v761
    %781 = vst [vmem:[%s769 + $0x58] sm:$0xff] %v762
    %782 = vst [vmem:[%s769 + $0x60] sm:$0xff] %v763
    %783 = vst [vmem:[%s769 + $0x68] sm:$0xff] %v764
    %784 = vst [vmem:[%s769 + $0x70] sm:$0xff] %v765
    %785 = vst [vmem:[%s769 + $0x78] sm:$0xff] %v766
    %v786 = vld [vmem:[%s1] sm:$0xff]
    %v787 = vld [vmem:[#allocation13] sm:$0xff]
    %v788 = vld [vmem:[#allocation13 + $0x8] sm:$0xff]
    %v789 = vld [vmem:[#allocation13 + $0x10] sm:$0xff]
    %v790 = vld [vmem:[#allocation13 + $0x18] sm:$0xff]
    %v791 = vld [vmem:[#allocation13 + $0x20] sm:$0xff]
    %v792 = vld [vmem:[#allocation13 + $0x28] sm:$0xff]
    %v793 = vld [vmem:[#allocation13 + $0x30] sm:$0xff]
    %v794 = vld [vmem:[#allocation13 + $0x38] sm:$0xff]
    %v795 = vld [vmem:[#allocation13 + $0x40] sm:$0xff]
    %v796 = vld [vmem:[#allocation13 + $0x48] sm:$0xff]
    %v797 = vld [vmem:[#allocation13 + $0x50] sm:$0xff]
    %v798 = vld [vmem:[#allocation13 + $0x58] sm:$0xff]
    %v799 = vld [vmem:[#allocation13 + $0x60] sm:$0xff]
    %v800 = vld [vmem:[#allocation13 + $0x68] sm:$0xff]
    %v801 = vld [vmem:[#allocation13 + $0x70] sm:$0xff]
    %v802 = vld [vmem:[#allocation13 + $0x78] sm:$0xff]
    %v803 = vld [vmem:[#allocation13 + $0x80] sm:$0xff]
    %v804 = vld [vmem:[#allocation13 + $0x88] sm:$0xff]
    %v805 = vld [vmem:[#allocation13 + $0x90] sm:$0xff]
    %v806 = vld [vmem:[#allocation13 + $0x98] sm:$0xff]
    %v807 = vld [vmem:[#allocation13 + $0xa0] sm:$0xff]
    %v808 = vld [vmem:[#allocation13 + $0xa8] sm:$0xff]
    %v809 = vld [vmem:[#allocation13 + $0xb0] sm:$0xff]
    %v810 = vld [vmem:[#allocation13 + $0xb8] sm:$0xff]
    %v811 = vld [vmem:[#allocation13 + $0xc0] sm:$0xff]
    %v812 = vld [vmem:[#allocation13 + $0xc8] sm:$0xff]
    %v813 = vld [vmem:[#allocation13 + $0xd0] sm:$0xff]
    %v814 = vld [vmem:[#allocation13 + $0xd8] sm:$0xff]
    %v815 = vld [vmem:[#allocation13 + $0xe0] sm:$0xff]
    %v816 = vld [vmem:[#allocation13 + $0xe8] sm:$0xff]
    %v817 = vld [vmem:[#allocation13 + $0xf0] sm:$0xff]
    %v818 = vld [vmem:[#allocation13 + $0xf8] sm:$0xff]
    %s819 = smul.u32 0, 8
    %v820 = vld [vmem:[#allocation2] sm:$0xff]
    %v821 = vld [vmem:[#allocation3] sm:$0xff]
    %v822 = vld [vmem:[#allocation4] sm:$0xff]
    %v823 = vld [vmem:[#allocation4 + $0x8] sm:$0xff]
    %v824 = vunpack.c.l.bf16 %v822
    %v825 = vunpack.c.h.bf16 %v822
    %v826 = vunpack.c.l.bf16 %v823
    %v827 = vunpack.c.h.bf16 %v823
    %v828 = vpack.c.bf16 %v820, %v820
    %v861 = vunpack.c.l.b16 %v787
    %v862 = vunpack.c.h.b16 %v787
    %v863 = vunpack.c.l.b16 %v788
    %v864 = vunpack.c.h.b16 %v788
    %v865 = vunpack.c.l.b16 %v789
    %v866 = vunpack.c.h.b16 %v789
    %v867 = vunpack.c.l.b16 %v790
    %v868 = vunpack.c.h.b16 %v790
    %v869 = vunpack.c.l.b16 %v791
    %v870 = vunpack.c.h.b16 %v791
    %v871 = vunpack.c.l.b16 %v792
    %v872 = vunpack.c.h.b16 %v792
    %v873 = vunpack.c.l.b16 %v793
    %v874 = vunpack.c.h.b16 %v793
    %v875 = vunpack.c.l.b16 %v794
    %v876 = vunpack.c.h.b16 %v794
    %v877 = vunpack.c.l.b16 %v795
    %v878 = vunpack.c.h.b16 %v795
    %v879 = vunpack.c.l.b16 %v796
    %v880 = vunpack.c.h.b16 %v796
    %v881 = vunpack.c.l.b16 %v797
    %v882 = vunpack.c.h.b16 %v797
    %v883 = vunpack.c.l.b16 %v798
    %v884 = vunpack.c.h.b16 %v798
    %v885 = vunpack.c.l.b16 %v799
    %v886 = vunpack.c.h.b16 %v799
    %v887 = vunpack.c.l.b16 %v800
    %v888 = vunpack.c.h.b16 %v800
    %v889 = vunpack.c.l.b16 %v801
    %v890 = vunpack.c.h.b16 %v801
    %v891 = vunpack.c.l.b16 %v802
    %v892 = vunpack.c.h.b16 %v802
    %v893 = vunpack.c.l.b16 %v803
    %v894 = vunpack.c.h.b16 %v803
    %v895 = vunpack.c.l.b16 %v804
    %v896 = vunpack.c.h.b16 %v804
    %v897 = vunpack.c.l.b16 %v805
    %v898 = vunpack.c.h.b16 %v805
    %v899 = vunpack.c.l.b16 %v806
    %v900 = vunpack.c.h.b16 %v806
    %v901 = vunpack.c.l.b16 %v807
    %v902 = vunpack.c.h.b16 %v807
    %v903 = vunpack.c.l.b16 %v808
    %v904 = vunpack.c.h.b16 %v808
    %v905 = vunpack.c.l.b16 %v809
    %v906 = vunpack.c.h.b16 %v809
    %v907 = vunpack.c.l.b16 %v810
    %v908 = vunpack.c.h.b16 %v810
    %v909 = vunpack.c.l.b16 %v811
    %v910 = vunpack.c.h.b16 %v811
    %v911 = vunpack.c.l.b16 %v812
    %v912 = vunpack.c.h.b16 %v812
    %v913 = vunpack.c.l.b16 %v813
    %v914 = vunpack.c.h.b16 %v813
    %v915 = vunpack.c.l.b16 %v814
    %v916 = vunpack.c.h.b16 %v814
    %v917 = vunpack.c.l.b16 %v815
    %v918 = vunpack.c.h.b16 %v815
    %v919 = vunpack.c.l.b16 %v816
    %v920 = vunpack.c.h.b16 %v816
    %v921 = vunpack.c.l.b16 %v817
    %v922 = vunpack.c.h.b16 %v817
    %v923 = vunpack.c.l.b16 %v818
    %v924 = vunpack.c.h.b16 %v818
    %v925 = vpack.c.b16 %v865, %v861
    %v926 = vpack.c.b16 %v866, %v862
    %v927 = vpack.c.b16 %v867, %v863
    %v928 = vpack.c.b16 %v868, %v864
    %v929 = vpack.c.b16 %v873, %v869
    %v930 = vpack.c.b16 %v874, %v870
    %v931 = vpack.c.b16 %v875, %v871
    %v932 = vpack.c.b16 %v876, %v872
    %v933 = vpack.c.b16 %v881, %v877
    %v934 = vpack.c.b16 %v882, %v878
    %v935 = vpack.c.b16 %v883, %v879
    %v936 = vpack.c.b16 %v884, %v880
    %v937 = vpack.c.b16 %v889, %v885
    %v938 = vpack.c.b16 %v890, %v886
    %v939 = vpack.c.b16 %v891, %v887
    %v940 = vpack.c.b16 %v892, %v888
    %v941 = vpack.c.b16 %v897, %v893
    %v942 = vpack.c.b16 %v898, %v894
    %v943 = vpack.c.b16 %v899, %v895
    %v944 = vpack.c.b16 %v900, %v896
    %v945 = vpack.c.b16 %v905, %v901
    %v946 = vpack.c.b16 %v906, %v902
    %v947 = vpack.c.b16 %v907, %v903
    %v948 = vpack.c.b16 %v908, %v904
    %v949 = vpack.c.b16 %v913, %v909
    %v950 = vpack.c.b16 %v914, %v910
    %v951 = vpack.c.b16 %v915, %v911
    %v952 = vpack.c.b16 %v916, %v912
    %v953 = vpack.c.b16 %v921, %v917
    %v954 = vpack.c.b16 %v922, %v918
    %v955 = vpack.c.b16 %v923, %v919
    %v956 = vpack.c.b16 %v924, %v920
    %989 = vmatpush.bf16.msra.mxu0 %v953
    %990 = vmatpush.bf16.msra.mxu0 %v949
    %991 = vmatpush.bf16.msra.mxu0 %v945
    %992 = vmatpush.bf16.msra.mxu0 %v941
    %993 = vmatpush.bf16.msra.mxu0 %v937
    %994 = vmatpush.bf16.msra.mxu0 %v933
    %995 = vmatpush.bf16.msra.mxu0 %v929
    %996 = vmatpush.bf16.msra.mxu0 %v925
    %997 = vmatmul.bf16.gmra.mxu0 %v828
    %v998 = vpop.f32.mrf.mxu0
    %v999 = vadd.f32 0.0, %v998
    %v1000 = vpop.f32.mrf.mxu0
    %1001 = vdwg.mxu0
    %1002 = vmatpush.bf16.msra.mxu0 %v954
    %1003 = vmatpush.bf16.msra.mxu0 %v950
    %1004 = vmatpush.bf16.msra.mxu0 %v946
    %1005 = vmatpush.bf16.msra.mxu0 %v942
    %1006 = vmatpush.bf16.msra.mxu0 %v938
    %1007 = vmatpush.bf16.msra.mxu0 %v934
    %1008 = vmatpush.bf16.msra.mxu0 %v930
    %1009 = vmatpush.bf16.msra.mxu0 %v926
    %1010 = vmatmul.bf16.gmra.mxu0 %v828
    %v1011 = vpop.f32.mrf.mxu0
    %v1012 = vadd.f32 0.0, %v1011
    %v1013 = vpop.f32.mrf.mxu0
    %1014 = vdwg.mxu0
    %1015 = vmatpush.bf16.msra.mxu0 %v955
    %1016 = vmatpush.bf16.msra.mxu0 %v951
    %1017 = vmatpush.bf16.msra.mxu0 %v947
    %1018 = vmatpush.bf16.msra.mxu0 %v943
    %1019 = vmatpush.bf16.msra.mxu0 %v939
    %1020 = vmatpush.bf16.msra.mxu0 %v935
    %1021 = vmatpush.bf16.msra.mxu0 %v931
    %1022 = vmatpush.bf16.msra.mxu0 %v927
    %1023 = vmatmul.bf16.gmra.mxu0 %v828
    %v1024 = vpop.f32.mrf.mxu0
    %v1025 = vadd.f32 0.0, %v1024
    %v1026 = vpop.f32.mrf.mxu0
    %1027 = vdwg.mxu0
    %1028 = vmatpush.bf16.msra.mxu0 %v956
    %1029 = vmatpush.bf16.msra.mxu0 %v952
    %1030 = vmatpush.bf16.msra.mxu0 %v948
    %1031 = vmatpush.bf16.msra.mxu0 %v944
    %1032 = vmatpush.bf16.msra.mxu0 %v940
    %1033 = vmatpush.bf16.msra.mxu0 %v936
    %1034 = vmatpush.bf16.msra.mxu0 %v932
    %1035 = vmatpush.bf16.msra.mxu0 %v928
    %1036 = vmatmul.bf16.gmra.mxu0 %v828
    %v1037 = vpop.f32.mrf.mxu0
    %v1038 = vadd.f32 0.0, %v1037
    %v1039 = vpop.f32.mrf.mxu0
    %1040 = vdwg.mxu0
    %v1041 = vadd.f32 %v824, %v999
    %v1042 = vadd.f32 %v825, %v1012
    %v1043 = vadd.f32 %v826, %v1025
    %v1044 = vadd.f32 %v827, %v1038
    %v1045 = vxor.u32 %v1041, 2147483648
    %v1046 = vxor.u32 %v1042, 2147483648
    %v1047 = vxor.u32 %v1043, 2147483648
    %v1048 = vmul.f32 %v1045, 1.442695
    %v1049 = vpow.pop %v1048
    %v1050 = vmul.f32 %v1046, 1.442695
    %v1051 = vpow.pop %v1050
    %v1052 = vmul.f32 %v1047, 1.442695
    %v1053 = vpow.pop %v1052
    %v1054 = vadd.f32 %v1049, 1.0
    %v1055 = vadd.f32 %v1051, 1.0
    %v1056 = vadd.f32 %v1053, 1.0
    %v1057 = vrcp.pop %v1054
    %v1058 = vmul.f32 %v1054, %v1057
    %v1059 = vsub.f32 1.0, %v1058
    %v1060 = vmul.f32 %v1057, %v1059
    %v1061 = vadd.f32 %v1057, %v1060
    %vm1062 = vweird.f32 %v1054
    %vm1063 = vweird.f32 %v1057
    %vm1064 = vmor %vm1062, %vm1063
    %v1065 = vsel %vm1064, %v1057, %v1061
    %v1066 = vand.u32 2147483647, %v1054
    %vm1067 = vcmp.eq.f32.partialorder %v1066, 8.507059e+37
    %v1068 = vand.u32 %v1054, 2147483648
    %v1069 = vor.u32 1.1754944e-38, %v1068
    %v1070 = vsel %vm1067, %v1069, %v1065
    %v1071 = vmul.f32 1.0, %v1070
    %v1072 = vrcp.pop %v1055
    %v1073 = vmul.f32 %v1055, %v1072
    %v1074 = vsub.f32 1.0, %v1073
    %v1075 = vmul.f32 %v1072, %v1074
    %v1076 = vadd.f32 %v1072, %v1075
    %vm1077 = vweird.f32 %v1055
    %vm1078 = vweird.f32 %v1072
    %vm1079 = vmor %vm1077, %vm1078
    %v1080 = vsel %vm1079, %v1072, %v1076
    %v1081 = vand.u32 2147483647, %v1055
    %vm1082 = vcmp.eq.f32.partialorder %v1081, 8.507059e+37
    %v1083 = vand.u32 %v1055, 2147483648
    %v1084 = vor.u32 1.1754944e-38, %v1083
    %v1085 = vsel %vm1082, %v1084, %v1080
    %v1086 = vmul.f32 1.0, %v1085
    %v1087 = vrcp.pop %v1056
    %v1088 = vmul.f32 %v1056, %v1087
    %v1089 = vsub.f32 1.0, %v1088
    %v1090 = vmul.f32 %v1087, %v1089
    %v1091 = vadd.f32 %v1087, %v1090
    %vm1092 = vweird.f32 %v1056
    %vm1093 = vweird.f32 %v1087
    %vm1094 = vmor %vm1092, %vm1093
    %v1095 = vsel %vm1094, %v1087, %v1091
    %v1096 = vand.u32 2147483647, %v1056
    %vm1097 = vcmp.eq.f32.partialorder %v1096, 8.507059e+37
    %v1098 = vand.u32 %v1056, 2147483648
    %v1099 = vor.u32 1.1754944e-38, %v1098
    %v1100 = vsel %vm1097, %v1099, %v1095
    %v1101 = vmul.f32 1.0, %v1100
    %v1102 = vtanh.pop %v1044
    %v1103 = vmul.f32 %v1086, %v821
    %v1104 = vmul.f32 %v1071, %v1102
    %v1105 = vadd.f32 %v1103, %v1104
    %v1106 = vtanh.pop %v1105
    %v1107 = vmul.f32 %v1101, %v1106
    %v1108 = vstv %s819
    %vm1109 = vcmp.lt.s32.totalorder %v1108, %v786
    %v1110 = vsel %vm1109, 1, 0
    %1111 = vset.pattern.permute.xlu0 0
    %1112 = vperm.xlu0 %1111, %v1110
    %v1113 = vpop.permute.xlu0 %1112
    %vm1114 = vcmp.eq.s32.totalorder %v1113, 1
    %v1115 = vsel %vm1114, %v1107, %v820
    %v1116 = vsel %vm1114, %v1105, %v821
    %s1117 = scalar_lea.vmem [#allocation4], 16
    %v1118 = vld [vmem:[%s1117] sm:$0xff]
    %v1119 = vld [vmem:[%s1117 + $0x8] sm:$0xff]
    %v1120 = vunpack.c.l.bf16 %v1118
    %v1121 = vunpack.c.h.bf16 %v1118
    %v1122 = vunpack.c.l.bf16 %v1119
    %v1123 = vunpack.c.h.bf16 %v1119
    %v1124 = vpack.c.bf16 %v1115, %v1115
    %1125 = vmatpush.bf16.msra.mxu0 %v953
    %1126 = vmatpush.bf16.msra.mxu0 %v949
    %1127 = vmatpush.bf16.msra.mxu0 %v945
    %1128 = vmatpush.bf16.msra.mxu0 %v941
    %1129 = vmatpush.bf16.msra.mxu0 %v937
    %1130 = vmatpush.bf16.msra.mxu0 %v933
    %1131 = vmatpush.bf16.msra.mxu0 %v929
    %1132 = vmatpush.bf16.msra.mxu0 %v925
    %1133 = vmatmul.bf16.gmra.mxu0 %v1124
    %v1134 = vpop.f32.mrf.mxu0
    %v1135 = vadd.f32 0.0, %v1134
    %v1136 = vpop.f32.mrf.mxu0
    %1137 = vdwg.mxu0
    %1138 = vmatpush.bf16.msra.mxu0 %v954
    %1139 = vmatpush.bf16.msra.mxu0 %v950
    %1140 = vmatpush.bf16.msra.mxu0 %v946
    %1141 = vmatpush.bf16.msra.mxu0 %v942
    %1142 = vmatpush.bf16.msra.mxu0 %v938
    %1143 = vmatpush.bf16.msra.mxu0 %v934
    %1144 = vmatpush.bf16.msra.mxu0 %v930
    %1145 = vmatpush.bf16.msra.mxu0 %v926
    %1146 = vmatmul.bf16.gmra.mxu0 %v1124
    %v1147 = vpop.f32.mrf.mxu0
    %v1148 = vadd.f32 0.0, %v1147
    %v1149 = vpop.f32.mrf.mxu0
    %1150 = vdwg.mxu0
    %1151 = vmatpush.bf16.msra.mxu0 %v955
    %1152 = vmatpush.bf16.msra.mxu0 %v951
    %1153 = vmatpush.bf16.msra.mxu0 %v947
    %1154 = vmatpush.bf16.msra.mxu0 %v943
    %1155 = vmatpush.bf16.msra.mxu0 %v939
    %1156 = vmatpush.bf16.msra.mxu0 %v935
    %1157 = vmatpush.bf16.msra.mxu0 %v931
    %1158 = vmatpush.bf16.msra.mxu0 %v927
    %1159 = vmatmul.bf16.gmra.mxu0 %v1124
    %v1160 = vpop.f32.mrf.mxu0
    %v1161 = vadd.f32 0.0, %v1160
    %v1162 = vpop.f32.mrf.mxu0
    %1163 = vdwg.mxu0
    %1164 = vmatpush.bf16.msra.mxu0 %v956
    %1165 = vmatpush.bf16.msra.mxu0 %v952
    %1166 = vmatpush.bf16.msra.mxu0 %v948
    %1167 = vmatpush.bf16.msra.mxu0 %v944
    %1168 = vmatpush.bf16.msra.mxu0 %v940
    %1169 = vmatpush.bf16.msra.mxu0 %v936
    %1170 = vmatpush.bf16.msra.mxu0 %v932
    %1171 = vmatpush.bf16.msra.mxu0 %v928
    %1172 = vmatmul.bf16.gmra.mxu0 %v1124
    %v1173 = vpop.f32.mrf.mxu0
    %v1174 = vadd.f32 0.0, %v1173
    %v1175 = vpop.f32.mrf.mxu0
    %1176 = vdwg.mxu0
    %v1177 = vadd.f32 %v1120, %v1135
    %v1178 = vadd.f32 %v1121, %v1148
    %v1179 = vadd.f32 %v1122, %v1161
    %v1180 = vadd.f32 %v1123, %v1174
    %v1181 = vxor.u32 %v1177, 2147483648
    %v1182 = vxor.u32 %v1178, 2147483648
    %v1183 = vxor.u32 %v1179, 2147483648
    %v1184 = vmul.f32 %v1181, 1.442695
    %v1185 = vpow.pop %v1184
    %v1186 = vmul.f32 %v1182, 1.442695
    %v1187 = vpow.pop %v1186
    %v1188 = vmul.f32 %v1183, 1.442695
    %v1189 = vpow.pop %v1188
    %v1190 = vadd.f32 %v1185, 1.0
    %v1191 = vadd.f32 %v1187, 1.0
    %v1192 = vadd.f32 %v1189, 1.0
    %v1193 = vrcp.pop %v1190
    %v1194 = vmul.f32 %v1190, %v1193
    %v1195 = vsub.f32 1.0, %v1194
    %v1196 = vmul.f32 %v1193, %v1195
    %v1197 = vadd.f32 %v1193, %v1196
    %vm1198 = vweird.f32 %v1190
    %vm1199 = vweird.f32 %v1193
    %vm1200 = vmor %vm1198, %vm1199
    %v1201 = vsel %vm1200, %v1193, %v1197
    %v1202 = vand.u32 2147483647, %v1190
    %vm1203 = vcmp.eq.f32.partialorder %v1202, 8.507059e+37
    %v1204 = vand.u32 %v1190, 2147483648
    %v1205 = vor.u32 1.1754944e-38, %v1204
    %v1206 = vsel %vm1203, %v1205, %v1201
    %v1207 = vmul.f32 1.0, %v1206
    %v1208 = vrcp.pop %v1191
    %v1209 = vmul.f32 %v1191, %v1208
    %v1210 = vsub.f32 1.0, %v1209
    %v1211 = vmul.f32 %v1208, %v1210
    %v1212 = vadd.f32 %v1208, %v1211
    %vm1213 = vweird.f32 %v1191
    %vm1214 = vweird.f32 %v1208
    %vm1215 = vmor %vm1213, %vm1214
    %v1216 = vsel %vm1215, %v1208, %v1212
    %v1217 = vand.u32 2147483647, %v1191
    %vm1218 = vcmp.eq.f32.partialorder %v1217, 8.507059e+37
    %v1219 = vand.u32 %v1191, 2147483648
    %v1220 = vor.u32 1.1754944e-38, %v1219
    %v1221 = vsel %vm1218, %v1220, %v1216
    %v1222 = vmul.f32 1.0, %v1221
    %v1223 = vrcp.pop %v1192
    %v1224 = vmul.f32 %v1192, %v1223
    %v1225 = vsub.f32 1.0, %v1224
    %v1226 = vmul.f32 %v1223, %v1225
    %v1227 = vadd.f32 %v1223, %v1226
    %vm1228 = vweird.f32 %v1192
    %vm1229 = vweird.f32 %v1223
    %vm1230 = vmor %vm1228, %vm1229
    %v1231 = vsel %vm1230, %v1223, %v1227
    %v1232 = vand.u32 2147483647, %v1192
    %vm1233 = vcmp.eq.f32.partialorder %v1232, 8.507059e+37
    %v1234 = vand.u32 %v1192, 2147483648
    %v1235 = vor.u32 1.1754944e-38, %v1234
    %v1236 = vsel %vm1233, %v1235, %v1231
    %v1237 = vmul.f32 1.0, %v1236
    %v1238 = vtanh.pop %v1180
    %v1239 = vmul.f32 %v1222, %v1116
    %v1240 = vmul.f32 %v1207, %v1238
    %v1241 = vadd.f32 %v1239, %v1240
    %v1242 = vtanh.pop %v1241
    %v1243 = vmul.f32 %v1237, %v1242
    %s1244 = sadd.s32 %s819, 1
    %v1245 = vstv %s1244
    %vm1246 = vcmp.lt.s32.totalorder %v1245, %v786
    %v1247 = vsel %vm1246, 1, 0
    %1248 = vset.pattern.permute.xlu0 0
    %1249 = vperm.xlu0 %1248, %v1247
    %v1250 = vpop.permute.xlu0 %1249
    %vm1251 = vcmp.eq.s32.totalorder %v1250, 1
    %v1252 = vsel %vm1251, %v1243, %v1115
    %v1253 = vsel %vm1251, %v1241, %v1116
    %s1254 = scalar_lea.vmem [#allocation4], 32
    %v1255 = vld [vmem:[%s1254] sm:$0xff]
    %v1256 = vld [vmem:[%s1254 + $0x8] sm:$0xff]
    %v1257 = vunpack.c.l.bf16 %v1255
    %v1258 = vunpack.c.h.bf16 %v1255
    %v1259 = vunpack.c.l.bf16 %v1256
    %v1260 = vunpack.c.h.bf16 %v1256
    %v1261 = vpack.c.bf16 %v1252, %v1252
    %1262 = vmatpush.bf16.msra.mxu0 %v953
    %1263 = vmatpush.bf16.msra.mxu0 %v949
    %1264 = vmatpush.bf16.msra.mxu0 %v945
    %1265 = vmatpush.bf16.msra.mxu0 %v941
    %1266 = vmatpush.bf16.msra.mxu0 %v937
    %1267 = vmatpush.bf16.msra.mxu0 %v933
    %1268 = vmatpush.bf16.msra.mxu0 %v929
    %1269 = vmatpush.bf16.msra.mxu0 %v925
    %1270 = vmatmul.bf16.gmra.mxu0 %v1261
    %v1271 = vpop.f32.mrf.mxu0
    %v1272 = vadd.f32 0.0, %v1271
    %v1273 = vpop.f32.mrf.mxu0
    %1274 = vdwg.mxu0
    %1275 = vmatpush.bf16.msra.mxu0 %v954
    %1276 = vmatpush.bf16.msra.mxu0 %v950
    %1277 = vmatpush.bf16.msra.mxu0 %v946
    %1278 = vmatpush.bf16.msra.mxu0 %v942
    %1279 = vmatpush.bf16.msra.mxu0 %v938
    %1280 = vmatpush.bf16.msra.mxu0 %v934
    %1281 = vmatpush.bf16.msra.mxu0 %v930
    %1282 = vmatpush.bf16.msra.mxu0 %v926
    %1283 = vmatmul.bf16.gmra.mxu0 %v1261
    %v1284 = vpop.f32.mrf.mxu0
    %v1285 = vadd.f32 0.0, %v1284
    %v1286 = vpop.f32.mrf.mxu0
    %1287 = vdwg.mxu0
    %1288 = vmatpush.bf16.msra.mxu0 %v955
    %1289 = vmatpush.bf16.msra.mxu0 %v951
    %1290 = vmatpush.bf16.msra.mxu0 %v947
    %1291 = vmatpush.bf16.msra.mxu0 %v943
    %1292 = vmatpush.bf16.msra.mxu0 %v939
    %1293 = vmatpush.bf16.msra.mxu0 %v935
    %1294 = vmatpush.bf16.msra.mxu0 %v931
    %1295 = vmatpush.bf16.msra.mxu0 %v927
    %1296 = vmatmul.bf16.gmra.mxu0 %v1261
    %v1297 = vpop.f32.mrf.mxu0
    %v1298 = vadd.f32 0.0, %v1297
    %v1299 = vpop.f32.mrf.mxu0
    %1300 = vdwg.mxu0
    %1301 = vmatpush.bf16.msra.mxu0 %v956
    %1302 = vmatpush.bf16.msra.mxu0 %v952
    %1303 = vmatpush.bf16.msra.mxu0 %v948
    %1304 = vmatpush.bf16.msra.mxu0 %v944
    %1305 = vmatpush.bf16.msra.mxu0 %v940
    %1306 = vmatpush.bf16.msra.mxu0 %v936
    %1307 = vmatpush.bf16.msra.mxu0 %v932
    %1308 = vmatpush.bf16.msra.mxu0 %v928
    %1309 = vmatmul.bf16.gmra.mxu0 %v1261
    %v1310 = vpop.f32.mrf.mxu0
    %v1311 = vadd.f32 0.0, %v1310
    %v1312 = vpop.f32.mrf.mxu0
    %1313 = vdwg.mxu0
    %v1314 = vadd.f32 %v1257, %v1272
    %v1315 = vadd.f32 %v1258, %v1285
    %v1316 = vadd.f32 %v1259, %v1298
    %v1317 = vadd.f32 %v1260, %v1311
    %v1318 = vxor.u32 %v1314, 2147483648
    %v1319 = vxor.u32 %v1315, 2147483648
    %v1320 = vxor.u32 %v1316, 2147483648
    %v1321 = vmul.f32 %v1318, 1.442695
    %v1322 = vpow.pop %v1321
    %v1323 = vmul.f32 %v1319, 1.442695
    %v1324 = vpow.pop %v1323
    %v1325 = vmul.f32 %v1320, 1.442695
    %v1326 = vpow.pop %v1325
    %v1327 = vadd.f32 %v1322, 1.0
    %v1328 = vadd.f32 %v1324, 1.0
    %v1329 = vadd.f32 %v1326, 1.0
    %v1330 = vrcp.pop %v1327
    %v1331 = vmul.f32 %v1327, %v1330
    %v1332 = vsub.f32 1.0, %v1331
    %v1333 = vmul.f32 %v1330, %v1332
    %v1334 = vadd.f32 %v1330, %v1333
    %vm1335 = vweird.f32 %v1327
    %vm1336 = vweird.f32 %v1330
    %vm1337 = vmor %vm1335, %vm1336
    %v1338 = vsel %vm1337, %v1330, %v1334
    %v1339 = vand.u32 2147483647, %v1327
    %vm1340 = vcmp.eq.f32.partialorder %v1339, 8.507059e+37
    %v1341 = vand.u32 %v1327, 2147483648
    %v1342 = vor.u32 1.1754944e-38, %v1341
    %v1343 = vsel %vm1340, %v1342, %v1338
    %v1344 = vmul.f32 1.0, %v1343
    %v1345 = vrcp.pop %v1328
    %v1346 = vmul.f32 %v1328, %v1345
    %v1347 = vsub.f32 1.0, %v1346
    %v1348 = vmul.f32 %v1345, %v1347
    %v1349 = vadd.f32 %v1345, %v1348
    %vm1350 = vweird.f32 %v1328
    %vm1351 = vweird.f32 %v1345
    %vm1352 = vmor %vm1350, %vm1351
    %v1353 = vsel %vm1352, %v1345, %v1349
    %v1354 = vand.u32 2147483647, %v1328
    %vm1355 = vcmp.eq.f32.partialorder %v1354, 8.507059e+37
    %v1356 = vand.u32 %v1328, 2147483648
    %v1357 = vor.u32 1.1754944e-38, %v1356
    %v1358 = vsel %vm1355, %v1357, %v1353
    %v1359 = vmul.f32 1.0, %v1358
    %v1360 = vrcp.pop %v1329
    %v1361 = vmul.f32 %v1329, %v1360
    %v1362 = vsub.f32 1.0, %v1361
    %v1363 = vmul.f32 %v1360, %v1362
    %v1364 = vadd.f32 %v1360, %v1363
    %vm1365 = vweird.f32 %v1329
    %vm1366 = vweird.f32 %v1360
    %vm1367 = vmor %vm1365, %vm1366
    %v1368 = vsel %vm1367, %v1360, %v1364
    %v1369 = vand.u32 2147483647, %v1329
    %vm1370 = vcmp.eq.f32.partialorder %v1369, 8.507059e+37
    %v1371 = vand.u32 %v1329, 2147483648
    %v1372 = vor.u32 1.1754944e-38, %v1371
    %v1373 = vsel %vm1370, %v1372, %v1368
    %v1374 = vmul.f32 1.0, %v1373
    %v1375 = vtanh.pop %v1317
    %v1376 = vmul.f32 %v1359, %v1253
    %v1377 = vmul.f32 %v1344, %v1375
    %v1378 = vadd.f32 %v1376, %v1377
    %v1379 = vtanh.pop %v1378
    %v1380 = vmul.f32 %v1374, %v1379
    %s1381 = sadd.s32 %s819, 2
    %v1382 = vstv %s1381
    %vm1383 = vcmp.lt.s32.totalorder %v1382, %v786
    %v1384 = vsel %vm1383, 1, 0
    %1385 = vset.pattern.permute.xlu0 0
    %1386 = vperm.xlu0 %1385, %v1384
    %v1387 = vpop.permute.xlu0 %1386
    %vm1388 = vcmp.eq.s32.totalorder %v1387, 1
    %v1389 = vsel %vm1388, %v1380, %v1252
    %v1390 = vsel %vm1388, %v1378, %v1253
    %s1391 = scalar_lea.vmem [#allocation4], 48
    %v1392 = vld [vmem:[%s1391] sm:$0xff]
    %v1393 = vld [vmem:[%s1391 + $0x8] sm:$0xff]
    %v1394 = vunpack.c.l.bf16 %v1392
    %v1395 = vunpack.c.h.bf16 %v1392
    %v1396 = vunpack.c.l.bf16 %v1393
    %v1397 = vunpack.c.h.bf16 %v1393
    %v1398 = vpack.c.bf16 %v1389, %v1389
    %1399 = vmatpush.bf16.msra.mxu0 %v953
    %1400 = vmatpush.bf16.msra.mxu0 %v949
    %1401 = vmatpush.bf16.msra.mxu0 %v945
    %1402 = vmatpush.bf16.msra.mxu0 %v941
    %1403 = vmatpush.bf16.msra.mxu0 %v937
    %1404 = vmatpush.bf16.msra.mxu0 %v933
    %1405 = vmatpush.bf16.msra.mxu0 %v929
    %1406 = vmatpush.bf16.msra.mxu0 %v925
    %1407 = vmatmul.bf16.gmra.mxu0 %v1398
    %v1408 = vpop.f32.mrf.mxu0
    %v1409 = vadd.f32 0.0, %v1408
    %v1410 = vpop.f32.mrf.mxu0
    %1411 = vdwg.mxu0
    %1412 = vmatpush.bf16.msra.mxu0 %v954
    %1413 = vmatpush.bf16.msra.mxu0 %v950
    %1414 = vmatpush.bf16.msra.mxu0 %v946
    %1415 = vmatpush.bf16.msra.mxu0 %v942
    %1416 = vmatpush.bf16.msra.mxu0 %v938
    %1417 = vmatpush.bf16.msra.mxu0 %v934
    %1418 = vmatpush.bf16.msra.mxu0 %v930
    %1419 = vmatpush.bf16.msra.mxu0 %v926
    %1420 = vmatmul.bf16.gmra.mxu0 %v1398
    %v1421 = vpop.f32.mrf.mxu0
    %v1422 = vadd.f32 0.0, %v1421
    %v1423 = vpop.f32.mrf.mxu0
    %1424 = vdwg.mxu0
    %1425 = vmatpush.bf16.msra.mxu0 %v955
    %1426 = vmatpush.bf16.msra.mxu0 %v951
    %1427 = vmatpush.bf16.msra.mxu0 %v947
    %1428 = vmatpush.bf16.msra.mxu0 %v943
    %1429 = vmatpush.bf16.msra.mxu0 %v939
    %1430 = vmatpush.bf16.msra.mxu0 %v935
    %1431 = vmatpush.bf16.msra.mxu0 %v931
    %1432 = vmatpush.bf16.msra.mxu0 %v927
    %1433 = vmatmul.bf16.gmra.mxu0 %v1398
    %v1434 = vpop.f32.mrf.mxu0
    %v1435 = vadd.f32 0.0, %v1434
    %v1436 = vpop.f32.mrf.mxu0
    %1437 = vdwg.mxu0
    %1438 = vmatpush.bf16.msra.mxu0 %v956
    %1439 = vmatpush.bf16.msra.mxu0 %v952
    %1440 = vmatpush.bf16.msra.mxu0 %v948
    %1441 = vmatpush.bf16.msra.mxu0 %v944
    %1442 = vmatpush.bf16.msra.mxu0 %v940
    %1443 = vmatpush.bf16.msra.mxu0 %v936
    %1444 = vmatpush.bf16.msra.mxu0 %v932
    %1445 = vmatpush.bf16.msra.mxu0 %v928
    %1446 = vmatmul.bf16.gmra.mxu0 %v1398
    %v1447 = vpop.f32.mrf.mxu0
    %v1448 = vadd.f32 0.0, %v1447
    %v1449 = vpop.f32.mrf.mxu0
    %1450 = vdwg.mxu0
    %v1451 = vadd.f32 %v1394, %v1409
    %v1452 = vadd.f32 %v1395, %v1422
    %v1453 = vadd.f32 %v1396, %v1435
    %v1454 = vadd.f32 %v1397, %v1448
    %v1455 = vxor.u32 %v1451, 2147483648
    %v1456 = vxor.u32 %v1452, 2147483648
    %v1457 = vxor.u32 %v1453, 2147483648
    %v1458 = vmul.f32 %v1455, 1.442695
    %v1459 = vpow.pop %v1458
    %v1460 = vmul.f32 %v1456, 1.442695
    %v1461 = vpow.pop %v1460
    %v1462 = vmul.f32 %v1457, 1.442695
    %v1463 = vpow.pop %v1462
    %v1464 = vadd.f32 %v1459, 1.0
    %v1465 = vadd.f32 %v1461, 1.0
    %v1466 = vadd.f32 %v1463, 1.0
    %v1467 = vrcp.pop %v1464
    %v1468 = vmul.f32 %v1464, %v1467
    %v1469 = vsub.f32 1.0, %v1468
    %v1470 = vmul.f32 %v1467, %v1469
    %v1471 = vadd.f32 %v1467, %v1470
    %vm1472 = vweird.f32 %v1464
    %vm1473 = vweird.f32 %v1467
    %vm1474 = vmor %vm1472, %vm1473
    %v1475 = vsel %vm1474, %v1467, %v1471
    %v1476 = vand.u32 2147483647, %v1464
    %vm1477 = vcmp.eq.f32.partialorder %v1476, 8.507059e+37
    %v1478 = vand.u32 %v1464, 2147483648
    %v1479 = vor.u32 1.1754944e-38, %v1478
    %v1480 = vsel %vm1477, %v1479, %v1475
    %v1481 = vmul.f32 1.0, %v1480
    %v1482 = vrcp.pop %v1465
    %v1483 = vmul.f32 %v1465, %v1482
    %v1484 = vsub.f32 1.0, %v1483
    %v1485 = vmul.f32 %v1482, %v1484
    %v1486 = vadd.f32 %v1482, %v1485
    %vm1487 = vweird.f32 %v1465
    %vm1488 = vweird.f32 %v1482
    %vm1489 = vmor %vm1487, %vm1488
    %v1490 = vsel %vm1489, %v1482, %v1486
    %v1491 = vand.u32 2147483647, %v1465
    %vm1492 = vcmp.eq.f32.partialorder %v1491, 8.507059e+37
    %v1493 = vand.u32 %v1465, 2147483648
    %v1494 = vor.u32 1.1754944e-38, %v1493
    %v1495 = vsel %vm1492, %v1494, %v1490
    %v1496 = vmul.f32 1.0, %v1495
    %v1497 = vrcp.pop %v1466
    %v1498 = vmul.f32 %v1466, %v1497
    %v1499 = vsub.f32 1.0, %v1498
    %v1500 = vmul.f32 %v1497, %v1499
    %v1501 = vadd.f32 %v1497, %v1500
    %vm1502 = vweird.f32 %v1466
    %vm1503 = vweird.f32 %v1497
    %vm1504 = vmor %vm1502, %vm1503
    %v1505 = vsel %vm1504, %v1497, %v1501
    %v1506 = vand.u32 2147483647, %v1466
    %vm1507 = vcmp.eq.f32.partialorder %v1506, 8.507059e+37
    %v1508 = vand.u32 %v1466, 2147483648
    %v1509 = vor.u32 1.1754944e-38, %v1508
    %v1510 = vsel %vm1507, %v1509, %v1505
    %v1511 = vmul.f32 1.0, %v1510
    %v1512 = vtanh.pop %v1454
    %v1513 = vmul.f32 %v1496, %v1390
    %v1514 = vmul.f32 %v1481, %v1512
    %v1515 = vadd.f32 %v1513, %v1514
    %v1516 = vtanh.pop %v1515
    %v1517 = vmul.f32 %v1511, %v1516
    %s1518 = sadd.s32 %s819, 3
    %v1519 = vstv %s1518
    %vm1520 = vcmp.lt.s32.totalorder %v1519, %v786
    %v1521 = vsel %vm1520, 1, 0
    %1522 = vset.pattern.permute.xlu0 0
    %1523 = vperm.xlu0 %1522, %v1521
    %v1524 = vpop.permute.xlu0 %1523
    %vm1525 = vcmp.eq.s32.totalorder %v1524, 1
    %v1526 = vsel %vm1525, %v1517, %v1389
    %v1527 = vsel %vm1525, %v1515, %v1390
    %s1528 = scalar_lea.vmem [#allocation4], 64
    %v1529 = vld [vmem:[%s1528] sm:$0xff]
    %v1530 = vld [vmem:[%s1528 + $0x8] sm:$0xff]
    %v1531 = vunpack.c.l.bf16 %v1529
    %v1532 = vunpack.c.h.bf16 %v1529
    %v1533 = vunpack.c.l.bf16 %v1530
    %v1534 = vunpack.c.h.bf16 %v1530
    %v1535 = vpack.c.bf16 %v1526, %v1526
    %1536 = vmatpush.bf16.msra.mxu0 %v953
    %1537 = vmatpush.bf16.msra.mxu0 %v949
    %1538 = vmatpush.bf16.msra.mxu0 %v945
    %1539 = vmatpush.bf16.msra.mxu0 %v941
    %1540 = vmatpush.bf16.msra.mxu0 %v937
    %1541 = vmatpush.bf16.msra.mxu0 %v933
    %1542 = vmatpush.bf16.msra.mxu0 %v929
    %1543 = vmatpush.bf16.msra.mxu0 %v925
    %1544 = vmatmul.bf16.gmra.mxu0 %v1535
    %v1545 = vpop.f32.mrf.mxu0
    %v1546 = vadd.f32 0.0, %v1545
    %v1547 = vpop.f32.mrf.mxu0
    %1548 = vdwg.mxu0
    %1549 = vmatpush.bf16.msra.mxu0 %v954
    %1550 = vmatpush.bf16.msra.mxu0 %v950
    %1551 = vmatpush.bf16.msra.mxu0 %v946
    %1552 = vmatpush.bf16.msra.mxu0 %v942
    %1553 = vmatpush.bf16.msra.mxu0 %v938
    %1554 = vmatpush.bf16.msra.mxu0 %v934
    %1555 = vmatpush.bf16.msra.mxu0 %v930
    %1556 = vmatpush.bf16.msra.mxu0 %v926
    %1557 = vmatmul.bf16.gmra.mxu0 %v1535
    %v1558 = vpop.f32.mrf.mxu0
    %v1559 = vadd.f32 0.0, %v1558
    %v1560 = vpop.f32.mrf.mxu0
    %1561 = vdwg.mxu0
    %1562 = vmatpush.bf16.msra.mxu0 %v955
    %1563 = vmatpush.bf16.msra.mxu0 %v951
    %1564 = vmatpush.bf16.msra.mxu0 %v947
    %1565 = vmatpush.bf16.msra.mxu0 %v943
    %1566 = vmatpush.bf16.msra.mxu0 %v939
    %1567 = vmatpush.bf16.msra.mxu0 %v935
    %1568 = vmatpush.bf16.msra.mxu0 %v931
    %1569 = vmatpush.bf16.msra.mxu0 %v927
    %1570 = vmatmul.bf16.gmra.mxu0 %v1535
    %v1571 = vpop.f32.mrf.mxu0
    %v1572 = vadd.f32 0.0, %v1571
    %v1573 = vpop.f32.mrf.mxu0
    %1574 = vdwg.mxu0
    %1575 = vmatpush.bf16.msra.mxu0 %v956
    %1576 = vmatpush.bf16.msra.mxu0 %v952
    %1577 = vmatpush.bf16.msra.mxu0 %v948
    %1578 = vmatpush.bf16.msra.mxu0 %v944
    %1579 = vmatpush.bf16.msra.mxu0 %v940
    %1580 = vmatpush.bf16.msra.mxu0 %v936
    %1581 = vmatpush.bf16.msra.mxu0 %v932
    %1582 = vmatpush.bf16.msra.mxu0 %v928
    %1583 = vmatmul.bf16.gmra.mxu0 %v1535
    %v1584 = vpop.f32.mrf.mxu0
    %v1585 = vadd.f32 0.0, %v1584
    %v1586 = vpop.f32.mrf.mxu0
    %1587 = vdwg.mxu0
    %v1588 = vadd.f32 %v1531, %v1546
    %v1589 = vadd.f32 %v1532, %v1559
    %v1590 = vadd.f32 %v1533, %v1572
    %v1591 = vadd.f32 %v1534, %v1585
    %v1592 = vxor.u32 %v1588, 2147483648
    %v1593 = vxor.u32 %v1589, 2147483648
    %v1594 = vxor.u32 %v1590, 2147483648
    %v1595 = vmul.f32 %v1592, 1.442695
    %v1596 = vpow.pop %v1595
    %v1597 = vmul.f32 %v1593, 1.442695
    %v1598 = vpow.pop %v1597
    %v1599 = vmul.f32 %v1594, 1.442695
    %v1600 = vpow.pop %v1599
    %v1601 = vadd.f32 %v1596, 1.0
    %v1602 = vadd.f32 %v1598, 1.0
    %v1603 = vadd.f32 %v1600, 1.0
    %v1604 = vrcp.pop %v1601
    %v1605 = vmul.f32 %v1601, %v1604
    %v1606 = vsub.f32 1.0, %v1605
    %v1607 = vmul.f32 %v1604, %v1606
    %v1608 = vadd.f32 %v1604, %v1607
    %vm1609 = vweird.f32 %v1601
    %vm1610 = vweird.f32 %v1604
    %vm1611 = vmor %vm1609, %vm1610
    %v1612 = vsel %vm1611, %v1604, %v1608
    %v1613 = vand.u32 2147483647, %v1601
    %vm1614 = vcmp.eq.f32.partialorder %v1613, 8.507059e+37
    %v1615 = vand.u32 %v1601, 2147483648
    %v1616 = vor.u32 1.1754944e-38, %v1615
    %v1617 = vsel %vm1614, %v1616, %v1612
    %v1618 = vmul.f32 1.0, %v1617
    %v1619 = vrcp.pop %v1602
    %v1620 = vmul.f32 %v1602, %v1619
    %v1621 = vsub.f32 1.0, %v1620
    %v1622 = vmul.f32 %v1619, %v1621
    %v1623 = vadd.f32 %v1619, %v1622
    %vm1624 = vweird.f32 %v1602
    %vm1625 = vweird.f32 %v1619
    %vm1626 = vmor %vm1624, %vm1625
    %v1627 = vsel %vm1626, %v1619, %v1623
    %v1628 = vand.u32 2147483647, %v1602
    %vm1629 = vcmp.eq.f32.partialorder %v1628, 8.507059e+37
    %v1630 = vand.u32 %v1602, 2147483648
    %v1631 = vor.u32 1.1754944e-38, %v1630
    %v1632 = vsel %vm1629, %v1631, %v1627
    %v1633 = vmul.f32 1.0, %v1632
    %v1634 = vrcp.pop %v1603
    %v1635 = vmul.f32 %v1603, %v1634
    %v1636 = vsub.f32 1.0, %v1635
    %v1637 = vmul.f32 %v1634, %v1636
    %v1638 = vadd.f32 %v1634, %v1637
    %vm1639 = vweird.f32 %v1603
    %vm1640 = vweird.f32 %v1634
    %vm1641 = vmor %vm1639, %vm1640
    %v1642 = vsel %vm1641, %v1634, %v1638
    %v1643 = vand.u32 2147483647, %v1603
    %vm1644 = vcmp.eq.f32.partialorder %v1643, 8.507059e+37
    %v1645 = vand.u32 %v1603, 2147483648
    %v1646 = vor.u32 1.1754944e-38, %v1645
    %v1647 = vsel %vm1644, %v1646, %v1642
    %v1648 = vmul.f32 1.0, %v1647
    %v1649 = vtanh.pop %v1591
    %v1650 = vmul.f32 %v1633, %v1527
    %v1651 = vmul.f32 %v1618, %v1649
    %v1652 = vadd.f32 %v1650, %v1651
    %v1653 = vtanh.pop %v1652
    %v1654 = vmul.f32 %v1648, %v1653
    %s1655 = sadd.s32 %s819, 4
    %v1656 = vstv %s1655
    %vm1657 = vcmp.lt.s32.totalorder %v1656, %v786
    %v1658 = vsel %vm1657, 1, 0
    %1659 = vset.pattern.permute.xlu0 0
    %1660 = vperm.xlu0 %1659, %v1658
    %v1661 = vpop.permute.xlu0 %1660
    %vm1662 = vcmp.eq.s32.totalorder %v1661, 1
    %v1663 = vsel %vm1662, %v1654, %v1526
    %v1664 = vsel %vm1662, %v1652, %v1527
    %s1665 = scalar_lea.vmem [#allocation4], 80
    %v1666 = vld [vmem:[%s1665] sm:$0xff]
    %v1667 = vld [vmem:[%s1665 + $0x8] sm:$0xff]
    %v1668 = vunpack.c.l.bf16 %v1666
    %v1669 = vunpack.c.h.bf16 %v1666
    %v1670 = vunpack.c.l.bf16 %v1667
    %v1671 = vunpack.c.h.bf16 %v1667
    %v1672 = vpack.c.bf16 %v1663, %v1663
    %1673 = vmatpush.bf16.msra.mxu0 %v953
    %1674 = vmatpush.bf16.msra.mxu0 %v949
    %1675 = vmatpush.bf16.msra.mxu0 %v945
    %1676 = vmatpush.bf16.msra.mxu0 %v941
    %1677 = vmatpush.bf16.msra.mxu0 %v937
    %1678 = vmatpush.bf16.msra.mxu0 %v933
    %1679 = vmatpush.bf16.msra.mxu0 %v929
    %1680 = vmatpush.bf16.msra.mxu0 %v925
    %1681 = vmatmul.bf16.gmra.mxu0 %v1672
    %v1682 = vpop.f32.mrf.mxu0
    %v1683 = vadd.f32 0.0, %v1682
    %v1684 = vpop.f32.mrf.mxu0
    %1685 = vdwg.mxu0
    %1686 = vmatpush.bf16.msra.mxu0 %v954
    %1687 = vmatpush.bf16.msra.mxu0 %v950
    %1688 = vmatpush.bf16.msra.mxu0 %v946
    %1689 = vmatpush.bf16.msra.mxu0 %v942
    %1690 = vmatpush.bf16.msra.mxu0 %v938
    %1691 = vmatpush.bf16.msra.mxu0 %v934
    %1692 = vmatpush.bf16.msra.mxu0 %v930
    %1693 = vmatpush.bf16.msra.mxu0 %v926
    %1694 = vmatmul.bf16.gmra.mxu0 %v1672
    %v1695 = vpop.f32.mrf.mxu0
    %v1696 = vadd.f32 0.0, %v1695
    %v1697 = vpop.f32.mrf.mxu0
    %1698 = vdwg.mxu0
    %1699 = vmatpush.bf16.msra.mxu0 %v955
    %1700 = vmatpush.bf16.msra.mxu0 %v951
    %1701 = vmatpush.bf16.msra.mxu0 %v947
    %1702 = vmatpush.bf16.msra.mxu0 %v943
    %1703 = vmatpush.bf16.msra.mxu0 %v939
    %1704 = vmatpush.bf16.msra.mxu0 %v935
    %1705 = vmatpush.bf16.msra.mxu0 %v931
    %1706 = vmatpush.bf16.msra.mxu0 %v927
    %1707 = vmatmul.bf16.gmra.mxu0 %v1672
    %v1708 = vpop.f32.mrf.mxu0
    %v1709 = vadd.f32 0.0, %v1708
    %v1710 = vpop.f32.mrf.mxu0
    %1711 = vdwg.mxu0
    %1712 = vmatpush.bf16.msra.mxu0 %v956
    %1713 = vmatpush.bf16.msra.mxu0 %v952
    %1714 = vmatpush.bf16.msra.mxu0 %v948
    %1715 = vmatpush.bf16.msra.mxu0 %v944
    %1716 = vmatpush.bf16.msra.mxu0 %v940
    %1717 = vmatpush.bf16.msra.mxu0 %v936
    %1718 = vmatpush.bf16.msra.mxu0 %v932
    %1719 = vmatpush.bf16.msra.mxu0 %v928
    %1720 = vmatmul.bf16.gmra.mxu0 %v1672
    %v1721 = vpop.f32.mrf.mxu0
    %v1722 = vadd.f32 0.0, %v1721
    %v1723 = vpop.f32.mrf.mxu0
    %1724 = vdwg.mxu0
    %v1725 = vadd.f32 %v1668, %v1683
    %v1726 = vadd.f32 %v1669, %v1696
    %v1727 = vadd.f32 %v1670, %v1709
    %v1728 = vadd.f32 %v1671, %v1722
    %v1729 = vxor.u32 %v1725, 2147483648
    %v1730 = vxor.u32 %v1726, 2147483648
    %v1731 = vxor.u32 %v1727, 2147483648
    %v1732 = vmul.f32 %v1729, 1.442695
    %v1733 = vpow.pop %v1732
    %v1734 = vmul.f32 %v1730, 1.442695
    %v1735 = vpow.pop %v1734
    %v1736 = vmul.f32 %v1731, 1.442695
    %v1737 = vpow.pop %v1736
    %v1738 = vadd.f32 %v1733, 1.0
    %v1739 = vadd.f32 %v1735, 1.0
    %v1740 = vadd.f32 %v1737, 1.0
    %v1741 = vrcp.pop %v1738
    %v1742 = vmul.f32 %v1738, %v1741
    %v1743 = vsub.f32 1.0, %v1742
    %v1744 = vmul.f32 %v1741, %v1743
    %v1745 = vadd.f32 %v1741, %v1744
    %vm1746 = vweird.f32 %v1738
    %vm1747 = vweird.f32 %v1741
    %vm1748 = vmor %vm1746, %vm1747
    %v1749 = vsel %vm1748, %v1741, %v1745
    %v1750 = vand.u32 2147483647, %v1738
    %vm1751 = vcmp.eq.f32.partialorder %v1750, 8.507059e+37
    %v1752 = vand.u32 %v1738, 2147483648
    %v1753 = vor.u32 1.1754944e-38, %v1752
    %v1754 = vsel %vm1751, %v1753, %v1749
    %v1755 = vmul.f32 1.0, %v1754
    %v1756 = vrcp.pop %v1739
    %v1757 = vmul.f32 %v1739, %v1756
    %v1758 = vsub.f32 1.0, %v1757
    %v1759 = vmul.f32 %v1756, %v1758
    %v1760 = vadd.f32 %v1756, %v1759
    %vm1761 = vweird.f32 %v1739
    %vm1762 = vweird.f32 %v1756
    %vm1763 = vmor %vm1761, %vm1762
    %v1764 = vsel %vm1763, %v1756, %v1760
    %v1765 = vand.u32 2147483647, %v1739
    %vm1766 = vcmp.eq.f32.partialorder %v1765, 8.507059e+37
    %v1767 = vand.u32 %v1739, 2147483648
    %v1768 = vor.u32 1.1754944e-38, %v1767
    %v1769 = vsel %vm1766, %v1768, %v1764
    %v1770 = vmul.f32 1.0, %v1769
    %v1771 = vrcp.pop %v1740
    %v1772 = vmul.f32 %v1740, %v1771
    %v1773 = vsub.f32 1.0, %v1772
    %v1774 = vmul.f32 %v1771, %v1773
    %v1775 = vadd.f32 %v1771, %v1774
    %vm1776 = vweird.f32 %v1740
    %vm1777 = vweird.f32 %v1771
    %vm1778 = vmor %vm1776, %vm1777
    %v1779 = vsel %vm1778, %v1771, %v1775
    %v1780 = vand.u32 2147483647, %v1740
    %vm1781 = vcmp.eq.f32.partialorder %v1780, 8.507059e+37
    %v1782 = vand.u32 %v1740, 2147483648
    %v1783 = vor.u32 1.1754944e-38, %v1782
    %v1784 = vsel %vm1781, %v1783, %v1779
    %v1785 = vmul.f32 1.0, %v1784
    %v1786 = vtanh.pop %v1728
    %v1787 = vmul.f32 %v1770, %v1664
    %v1788 = vmul.f32 %v1755, %v1786
    %v1789 = vadd.f32 %v1787, %v1788
    %v1790 = vtanh.pop %v1789
    %v1791 = vmul.f32 %v1785, %v1790
    %s1792 = sadd.s32 %s819, 5
    %v1793 = vstv %s1792
    %vm1794 = vcmp.lt.s32.totalorder %v1793, %v786
    %v1795 = vsel %vm1794, 1, 0
    %1796 = vset.pattern.permute.xlu0 0
    %1797 = vperm.xlu0 %1796, %v1795
    %v1798 = vpop.permute.xlu0 %1797
    %vm1799 = vcmp.eq.s32.totalorder %v1798, 1
    %v1800 = vsel %vm1799, %v1791, %v1663
    %v1801 = vsel %vm1799, %v1789, %v1664
    %s1802 = scalar_lea.vmem [#allocation4], 96
    %v1803 = vld [vmem:[%s1802] sm:$0xff]
    %v1804 = vld [vmem:[%s1802 + $0x8] sm:$0xff]
    %v1805 = vunpack.c.l.bf16 %v1803
    %v1806 = vunpack.c.h.bf16 %v1803
    %v1807 = vunpack.c.l.bf16 %v1804
    %v1808 = vunpack.c.h.bf16 %v1804
    %v1809 = vpack.c.bf16 %v1800, %v1800
    %1810 = vmatpush.bf16.msra.mxu0 %v953
    %1811 = vmatpush.bf16.msra.mxu0 %v949
    %1812 = vmatpush.bf16.msra.mxu0 %v945
    %1813 = vmatpush.bf16.msra.mxu0 %v941
    %1814 = vmatpush.bf16.msra.mxu0 %v937
    %1815 = vmatpush.bf16.msra.mxu0 %v933
    %1816 = vmatpush.bf16.msra.mxu0 %v929
    %1817 = vmatpush.bf16.msra.mxu0 %v925
    %1818 = vmatmul.bf16.gmra.mxu0 %v1809
    %v1819 = vpop.f32.mrf.mxu0
    %v1820 = vadd.f32 0.0, %v1819
    %v1821 = vpop.f32.mrf.mxu0
    %1822 = vdwg.mxu0
    %1823 = vmatpush.bf16.msra.mxu0 %v954
    %1824 = vmatpush.bf16.msra.mxu0 %v950
    %1825 = vmatpush.bf16.msra.mxu0 %v946
    %1826 = vmatpush.bf16.msra.mxu0 %v942
    %1827 = vmatpush.bf16.msra.mxu0 %v938
    %1828 = vmatpush.bf16.msra.mxu0 %v934
    %1829 = vmatpush.bf16.msra.mxu0 %v930
    %1830 = vmatpush.bf16.msra.mxu0 %v926
    %1831 = vmatmul.bf16.gmra.mxu0 %v1809
    %v1832 = vpop.f32.mrf.mxu0
    %v1833 = vadd.f32 0.0, %v1832
    %v1834 = vpop.f32.mrf.mxu0
    %1835 = vdwg.mxu0
    %1836 = vmatpush.bf16.msra.mxu0 %v955
    %1837 = vmatpush.bf16.msra.mxu0 %v951
    %1838 = vmatpush.bf16.msra.mxu0 %v947
    %1839 = vmatpush.bf16.msra.mxu0 %v943
    %1840 = vmatpush.bf16.msra.mxu0 %v939
    %1841 = vmatpush.bf16.msra.mxu0 %v935
    %1842 = vmatpush.bf16.msra.mxu0 %v931
    %1843 = vmatpush.bf16.msra.mxu0 %v927
    %1844 = vmatmul.bf16.gmra.mxu0 %v1809
    %v1845 = vpop.f32.mrf.mxu0
    %v1846 = vadd.f32 0.0, %v1845
    %v1847 = vpop.f32.mrf.mxu0
    %1848 = vdwg.mxu0
    %1849 = vmatpush.bf16.msra.mxu0 %v956
    %1850 = vmatpush.bf16.msra.mxu0 %v952
    %1851 = vmatpush.bf16.msra.mxu0 %v948
    %1852 = vmatpush.bf16.msra.mxu0 %v944
    %1853 = vmatpush.bf16.msra.mxu0 %v940
    %1854 = vmatpush.bf16.msra.mxu0 %v936
    %1855 = vmatpush.bf16.msra.mxu0 %v932
    %1856 = vmatpush.bf16.msra.mxu0 %v928
    %1857 = vmatmul.bf16.gmra.mxu0 %v1809
    %v1858 = vpop.f32.mrf.mxu0
    %v1859 = vadd.f32 0.0, %v1858
    %v1860 = vpop.f32.mrf.mxu0
    %1861 = vdwg.mxu0
    %v1862 = vadd.f32 %v1805, %v1820
    %v1863 = vadd.f32 %v1806, %v1833
    %v1864 = vadd.f32 %v1807, %v1846
    %v1865 = vadd.f32 %v1808, %v1859
    %v1866 = vxor.u32 %v1862, 2147483648
    %v1867 = vxor.u32 %v1863, 2147483648
    %v1868 = vxor.u32 %v1864, 2147483648
    %v1869 = vmul.f32 %v1866, 1.442695
    %v1870 = vpow.pop %v1869
    %v1871 = vmul.f32 %v1867, 1.442695
    %v1872 = vpow.pop %v1871
    %v1873 = vmul.f32 %v1868, 1.442695
    %v1874 = vpow.pop %v1873
    %v1875 = vadd.f32 %v1870, 1.0
    %v1876 = vadd.f32 %v1872, 1.0
    %v1877 = vadd.f32 %v1874, 1.0
    %v1878 = vrcp.pop %v1875
    %v1879 = vmul.f32 %v1875, %v1878
    %v1880 = vsub.f32 1.0, %v1879
    %v1881 = vmul.f32 %v1878, %v1880
    %v1882 = vadd.f32 %v1878, %v1881
    %vm1883 = vweird.f32 %v1875
    %vm1884 = vweird.f32 %v1878
    %vm1885 = vmor %vm1883, %vm1884
    %v1886 = vsel %vm1885, %v1878, %v1882
    %v1887 = vand.u32 2147483647, %v1875
    %vm1888 = vcmp.eq.f32.partialorder %v1887, 8.507059e+37
    %v1889 = vand.u32 %v1875, 2147483648
    %v1890 = vor.u32 1.1754944e-38, %v1889
    %v1891 = vsel %vm1888, %v1890, %v1886
    %v1892 = vmul.f32 1.0, %v1891
    %v1893 = vrcp.pop %v1876
    %v1894 = vmul.f32 %v1876, %v1893
    %v1895 = vsub.f32 1.0, %v1894
    %v1896 = vmul.f32 %v1893, %v1895
    %v1897 = vadd.f32 %v1893, %v1896
    %vm1898 = vweird.f32 %v1876
    %vm1899 = vweird.f32 %v1893
    %vm1900 = vmor %vm1898, %vm1899
    %v1901 = vsel %vm1900, %v1893, %v1897
    %v1902 = vand.u32 2147483647, %v1876
    %vm1903 = vcmp.eq.f32.partialorder %v1902, 8.507059e+37
    %v1904 = vand.u32 %v1876, 2147483648
    %v1905 = vor.u32 1.1754944e-38, %v1904
    %v1906 = vsel %vm1903, %v1905, %v1901
    %v1907 = vmul.f32 1.0, %v1906
    %v1908 = vrcp.pop %v1877
    %v1909 = vmul.f32 %v1877, %v1908
    %v1910 = vsub.f32 1.0, %v1909
    %v1911 = vmul.f32 %v1908, %v1910
    %v1912 = vadd.f32 %v1908, %v1911
    %vm1913 = vweird.f32 %v1877
    %vm1914 = vweird.f32 %v1908
    %vm1915 = vmor %vm1913, %vm1914
    %v1916 = vsel %vm1915, %v1908, %v1912
    %v1917 = vand.u32 2147483647, %v1877
    %vm1918 = vcmp.eq.f32.partialorder %v1917, 8.507059e+37
    %v1919 = vand.u32 %v1877, 2147483648
    %v1920 = vor.u32 1.1754944e-38, %v1919
    %v1921 = vsel %vm1918, %v1920, %v1916
    %v1922 = vmul.f32 1.0, %v1921
    %v1923 = vtanh.pop %v1865
    %v1924 = vmul.f32 %v1907, %v1801
    %v1925 = vmul.f32 %v1892, %v1923
    %v1926 = vadd.f32 %v1924, %v1925
    %v1927 = vtanh.pop %v1926
    %v1928 = vmul.f32 %v1922, %v1927
    %s1929 = sadd.s32 %s819, 6
    %v1930 = vstv %s1929
    %vm1931 = vcmp.lt.s32.totalorder %v1930, %v786
    %v1932 = vsel %vm1931, 1, 0
    %1933 = vset.pattern.permute.xlu0 0
    %1934 = vperm.xlu0 %1933, %v1932
    %v1935 = vpop.permute.xlu0 %1934
    %vm1936 = vcmp.eq.s32.totalorder %v1935, 1
    %v1937 = vsel %vm1936, %v1928, %v1800
    %v1938 = vsel %vm1936, %v1926, %v1801
    %s1939 = scalar_lea.vmem [#allocation4], 112
    %v1940 = vld [vmem:[%s1939] sm:$0xff]
    %v1941 = vld [vmem:[%s1939 + $0x8] sm:$0xff]
    %v1942 = vunpack.c.l.bf16 %v1940
    %v1943 = vunpack.c.h.bf16 %v1940
    %v1944 = vunpack.c.l.bf16 %v1941
    %v1945 = vunpack.c.h.bf16 %v1941
    %v1946 = vpack.c.bf16 %v1937, %v1937
    %1947 = vmatpush.bf16.msra.mxu0 %v953
    %1948 = vmatpush.bf16.msra.mxu0 %v949
    %1949 = vmatpush.bf16.msra.mxu0 %v945
    %1950 = vmatpush.bf16.msra.mxu0 %v941
    %1951 = vmatpush.bf16.msra.mxu0 %v937
    %1952 = vmatpush.bf16.msra.mxu0 %v933
    %1953 = vmatpush.bf16.msra.mxu0 %v929
    %1954 = vmatpush.bf16.msra.mxu0 %v925
    %1955 = vmatmul.bf16.gmra.mxu0 %v1946
    %v1956 = vpop.f32.mrf.mxu0
    %v1957 = vadd.f32 0.0, %v1956
    %v1958 = vpop.f32.mrf.mxu0
    %1959 = vdwg.mxu0
    %1960 = vmatpush.bf16.msra.mxu0 %v954
    %1961 = vmatpush.bf16.msra.mxu0 %v950
    %1962 = vmatpush.bf16.msra.mxu0 %v946
    %1963 = vmatpush.bf16.msra.mxu0 %v942
    %1964 = vmatpush.bf16.msra.mxu0 %v938
    %1965 = vmatpush.bf16.msra.mxu0 %v934
    %1966 = vmatpush.bf16.msra.mxu0 %v930
    %1967 = vmatpush.bf16.msra.mxu0 %v926
    %1968 = vmatmul.bf16.gmra.mxu0 %v1946
    %v1969 = vpop.f32.mrf.mxu0
    %v1970 = vadd.f32 0.0, %v1969
    %v1971 = vpop.f32.mrf.mxu0
    %1972 = vdwg.mxu0
    %1973 = vmatpush.bf16.msra.mxu0 %v955
    %1974 = vmatpush.bf16.msra.mxu0 %v951
    %1975 = vmatpush.bf16.msra.mxu0 %v947
    %1976 = vmatpush.bf16.msra.mxu0 %v943
    %1977 = vmatpush.bf16.msra.mxu0 %v939
    %1978 = vmatpush.bf16.msra.mxu0 %v935
    %1979 = vmatpush.bf16.msra.mxu0 %v931
    %1980 = vmatpush.bf16.msra.mxu0 %v927
    %1981 = vmatmul.bf16.gmra.mxu0 %v1946
    %v1982 = vpop.f32.mrf.mxu0
    %v1983 = vadd.f32 0.0, %v1982
    %v1984 = vpop.f32.mrf.mxu0
    %1985 = vdwg.mxu0
    %1986 = vmatpush.bf16.msra.mxu0 %v956
    %1987 = vmatpush.bf16.msra.mxu0 %v952
    %1988 = vmatpush.bf16.msra.mxu0 %v948
    %1989 = vmatpush.bf16.msra.mxu0 %v944
    %1990 = vmatpush.bf16.msra.mxu0 %v940
    %1991 = vmatpush.bf16.msra.mxu0 %v936
    %1992 = vmatpush.bf16.msra.mxu0 %v932
    %1993 = vmatpush.bf16.msra.mxu0 %v928
    %1994 = vmatmul.bf16.gmra.mxu0 %v1946
    %v1995 = vpop.f32.mrf.mxu0
    %v1996 = vadd.f32 0.0, %v1995
    %v1997 = vpop.f32.mrf.mxu0
    %1998 = vdwg.mxu0
    %v1999 = vadd.f32 %v1942, %v1957
    %v2000 = vadd.f32 %v1943, %v1970
    %v2001 = vadd.f32 %v1944, %v1983
    %v2002 = vadd.f32 %v1945, %v1996
    %v2003 = vxor.u32 %v1999, 2147483648
    %v2004 = vxor.u32 %v2000, 2147483648
    %v2005 = vxor.u32 %v2001, 2147483648
    %v2006 = vmul.f32 %v2003, 1.442695
    %v2007 = vpow.pop %v2006
    %v2008 = vmul.f32 %v2004, 1.442695
    %v2009 = vpow.pop %v2008
    %v2010 = vmul.f32 %v2005, 1.442695
    %v2011 = vpow.pop %v2010
    %v2012 = vadd.f32 %v2007, 1.0
    %v2013 = vadd.f32 %v2009, 1.0
    %v2014 = vadd.f32 %v2011, 1.0
    %v2015 = vrcp.pop %v2012
    %v2016 = vmul.f32 %v2012, %v2015
    %v2017 = vsub.f32 1.0, %v2016
    %v2018 = vmul.f32 %v2015, %v2017
    %v2019 = vadd.f32 %v2015, %v2018
    %vm2020 = vweird.f32 %v2012
    %vm2021 = vweird.f32 %v2015
    %vm2022 = vmor %vm2020, %vm2021
    %v2023 = vsel %vm2022, %v2015, %v2019
    %v2024 = vand.u32 2147483647, %v2012
    %vm2025 = vcmp.eq.f32.partialorder %v2024, 8.507059e+37
    %v2026 = vand.u32 %v2012, 2147483648
    %v2027 = vor.u32 1.1754944e-38, %v2026
    %v2028 = vsel %vm2025, %v2027, %v2023
    %v2029 = vmul.f32 1.0, %v2028
    %v2030 = vrcp.pop %v2013
    %v2031 = vmul.f32 %v2013, %v2030
    %v2032 = vsub.f32 1.0, %v2031
    %v2033 = vmul.f32 %v2030, %v2032
    %v2034 = vadd.f32 %v2030, %v2033
    %vm2035 = vweird.f32 %v2013
    %vm2036 = vweird.f32 %v2030
    %vm2037 = vmor %vm2035, %vm2036
    %v2038 = vsel %vm2037, %v2030, %v2034
    %v2039 = vand.u32 2147483647, %v2013
    %vm2040 = vcmp.eq.f32.partialorder %v2039, 8.507059e+37
    %v2041 = vand.u32 %v2013, 2147483648
    %v2042 = vor.u32 1.1754944e-38, %v2041
    %v2043 = vsel %vm2040, %v2042, %v2038
    %v2044 = vmul.f32 1.0, %v2043
    %v2045 = vrcp.pop %v2014
    %v2046 = vmul.f32 %v2014, %v2045
    %v2047 = vsub.f32 1.0, %v2046
    %v2048 = vmul.f32 %v2045, %v2047
    %v2049 = vadd.f32 %v2045, %v2048
    %vm2050 = vweird.f32 %v2014
    %vm2051 = vweird.f32 %v2045
    %vm2052 = vmor %vm2050, %vm2051
    %v2053 = vsel %vm2052, %v2045, %v2049
    %v2054 = vand.u32 2147483647, %v2014
    %vm2055 = vcmp.eq.f32.partialorder %v2054, 8.507059e+37
    %v2056 = vand.u32 %v2014, 2147483648
    %v2057 = vor.u32 1.1754944e-38, %v2056
    %v2058 = vsel %vm2055, %v2057, %v2053
    %v2059 = vmul.f32 1.0, %v2058
    %v2060 = vtanh.pop %v2002
    %v2061 = vmul.f32 %v2044, %v1938
    %v2062 = vmul.f32 %v2029, %v2060
    %v2063 = vadd.f32 %v2061, %v2062
    %v2064 = vtanh.pop %v2063
    %v2065 = vmul.f32 %v2059, %v2064
    %s2066 = sadd.s32 %s819, 7
    %v2067 = vstv %s2066
    %vm2068 = vcmp.lt.s32.totalorder %v2067, %v786
    %v2069 = vsel %vm2068, 1, 0
    %2070 = vset.pattern.permute.xlu0 0
    %2071 = vperm.xlu0 %2070, %v2069
    %v2072 = vpop.permute.xlu0 %2071
    %vm2073 = vcmp.eq.s32.totalorder %v2072, 1
    %v2074 = vsel %vm2073, %v2065, %v1937
    %v2075 = vsel %vm2073, %v2063, %v1938
    %2076 = vst [vmem:[#allocation2] sm:$0xff] %v2074
    %2077 = vst [vmem:[#allocation3] sm:$0xff] %v2075
    // Predicated region
    $region82: #{tpu_custom_call.1} parent=1 // pred_check
      %p2078 = pneg %p136
    $region83: #{tpu_custom_call.1} parent=1 // pred_check_branch
      %2080 = sbr.rel (%p2078) target = $region85
    $region84: #{tpu_custom_call.1} parent=1 // pred_region
      %2081 = vadd.xlane.f32.xlu0 %v2074
      %v2082 = vpop.xlane.xlu0 %2081
      %v2083 = vmul.f32 %v2082, 0.03125
      %v2084 = vsub.f32 %v2074, %v2083
      %v2085 = vmul.f32 %v2084, %v228
      %v2086 = vmul.f32 %v2085, %v2085
      %2087 = vadd.xlane.f32.xlu0 %v2086
      %v2088 = vpop.xlane.xlu0 %2087
      %v2089 = vmul.f32 %v2088, 0.03125
      %v2090 = vadd.f32 %v2089, 1e-05
      %v2091 = vrsqrt.pop %v2090
      %v2092 = vmul.f32 %v2091, %v2090
      %v2093 = vmul.f32 %v2092, %v2091
      %v2094 = vmul.f32 0.5, %v2093
      %v2095 = vsub.f32 1.5, %v2094
      %v2096 = vmul.f32 %v2091, %v2095
      %vm2097 = vweird.f32 %v2090
      %vm2098 = vweird.f32 %v2091
      %vm2099 = vmor %vm2097, %vm2098
      %v2100 = vsel %vm2099, %v2091, %v2096
      %v2101 = vmul.f32 %v2085, %v2100
      %v2102 = vld [vmem:[%s9] sm:$0x1]
      %v2104 = vperm.slane %v2102, 0
      %v2106 = vmul.f32 %v2101, %v2104
      %v2107 = vld [vmem:[%s10] sm:$0x1]
      %v2109 = vperm.slane %v2107, 0
      %v2111 = vadd.f32 %v2106, %v2109
      %v2112 = vpack.c.bf16 %v2111, %v2111
      %v2113 = vld [vmem:[#allocation14] sm:$0xf]
      %v2114 = vld [vmem:[#allocation14 + $0x4] sm:$0xf]
      %v2115 = vld [vmem:[#allocation14 + $0x8] sm:$0xf]
      %v2116 = vld [vmem:[#allocation14 + $0xc] sm:$0xf]
      %v2117 = vld [vmem:[#allocation14 + $0x10] sm:$0xf]
      %v2118 = vld [vmem:[#allocation14 + $0x14] sm:$0xf]
      %v2119 = vld [vmem:[#allocation14 + $0x18] sm:$0xf]
      %v2120 = vld [vmem:[#allocation14 + $0x1c] sm:$0xf]
      %v2121 = vld [vmem:[#allocation14 + $0x20] sm:$0xf]
      %v2122 = vld [vmem:[#allocation14 + $0x24] sm:$0xf]
      %v2123 = vld [vmem:[#allocation14 + $0x28] sm:$0xf]
      %v2124 = vld [vmem:[#allocation14 + $0x2c] sm:$0xf]
      %v2125 = vld [vmem:[#allocation14 + $0x30] sm:$0xf]
      %v2126 = vld [vmem:[#allocation14 + $0x34] sm:$0xf]
      %v2127 = vld [vmem:[#allocation14 + $0x38] sm:$0xf]
      %v2128 = vld [vmem:[#allocation14 + $0x3c] sm:$0xf]
      %v2129 = vld [vmem:[%s12] sm:$0x1]
      %v2131 = vperm.slane %v2129, 0
      %v2149 = vunpack.c.l.b16 %v2113
      %v2150 = vunpack.c.l.b16 %v2114
      %v2151 = vunpack.c.l.b16 %v2115
      %v2152 = vunpack.c.l.b16 %v2116
      %v2153 = vunpack.c.l.b16 %v2117
      %v2154 = vunpack.c.l.b16 %v2118
      %v2155 = vunpack.c.l.b16 %v2119
      %v2156 = vunpack.c.l.b16 %v2120
      %v2157 = vunpack.c.l.b16 %v2121
      %v2158 = vunpack.c.l.b16 %v2122
      %v2159 = vunpack.c.l.b16 %v2123
      %v2160 = vunpack.c.l.b16 %v2124
      %v2161 = vunpack.c.l.b16 %v2125
      %v2162 = vunpack.c.l.b16 %v2126
      %v2163 = vunpack.c.l.b16 %v2127
      %v2164 = vunpack.c.l.b16 %v2128
      %v2165 = vpack.c.b16 %v2150, %v2149
      %v2166 = vpack.c.b16 %v2152, %v2151
      %v2167 = vpack.c.b16 %v2154, %v2153
      %v2168 = vpack.c.b16 %v2156, %v2155
      %v2169 = vpack.c.b16 %v2158, %v2157
      %v2170 = vpack.c.b16 %v2160, %v2159
      %v2171 = vpack.c.b16 %v2162, %v2161
      %v2172 = vpack.c.b16 %v2164, %v2163
      %2181 = vmatpush.bf16.msra.mxu0 %v2172
      %2182 = vmatpush.bf16.msra.mxu0 %v2171
      %2183 = vmatpush.bf16.msra.mxu0 %v2170
      %2184 = vmatpush.bf16.msra.mxu0 %v2169
      %2185 = vmatpush.bf16.msra.mxu0 %v2168
      %2186 = vmatpush.bf16.msra.mxu0 %v2167
      %2187 = vmatpush.bf16.msra.mxu0 %v2166
      %2188 = vmatpush.bf16.msra.mxu0 %v2165
      %2189 = vmatmul.bf16.gmra.mxu0 %v2112
      %v2190 = vpop.f32.mrf.mxu0
      %v2191 = vadd.f32 %v2131, %v2190
      %v2192 = vpop.f32.mrf.mxu0
      %2193 = vdwg.mxu0
      %v2194 = vtanh.pop %v2191
      %2195 = vst [vmem:[#allocation16] sm:$0xff] %v2194
    $region85: #{tpu_custom_call.1} parent=1 // pred_fallthru
      _
    // Predicated region
    $region86: #{tpu_custom_call.1} parent=1 // pred_check
      _
    $region87: #{tpu_custom_call.1} parent=1 // pred_check_branch
      %2197 = sbr.rel (0) target = $region89
    $region88: #{tpu_custom_call.1} parent=1 // pred_region
      %2199 = vsyncadd [#allocation7], 0
      %s2201 = sshll.u32 [#allocation16], 4
      %s2202 = int_to_ptr.vmem [resolvable:$true] %s2201
      %s2203 = sshll.u32 %s13, 4
      %s2204 = int_to_ptr.hbm [resolvable:$true] %s2203
      %2206 = dma.vmem_to_hbm [thread:$0]  %s2202, 128, %s2204, [#allocation7]
    $region89: #{tpu_custom_call.1} parent=1 // pred_fallthru
      _
    // Predicated region
    $region90: #{tpu_custom_call.1} parent=1 // pred_check
      _
    $region91: #{tpu_custom_call.1} parent=1 // pred_check_branch
      %2208 = sbr.rel (0) target = $region93
    $region92: #{tpu_custom_call.1} parent=1 // pred_region
      %2210 = dma.done [#allocation7], 128
    $region93: #{tpu_custom_call.1} parent=1 // pred_fallthru
      _
    %2211 = vsyncpa [#allocation6], 1
    %2212 = vsyncpa [#allocation9], 1
    %2213 = vsyncpa [#allocation12], 1
    %2214 = vsyncpa [#allocation15], 1
    %2215 = vsyncpa [#allocation7], 1

</llo_original>
